<compile_context>
chip_gen: v5e
topology: v5e:2x2
jax: 0.10.0
libtpu: 0.0.40
codegen_flags: <defaults>
</compile_context>

<pallas_src>
import functools
import numpy as np
import jax
import jax.numpy as jnp
from jax.experimental import pallas as pl
from jax.experimental.pallas import tpu as pltpu


def _cvar_kernel(row_ref, col_ref, sum_out_ref, cnt_out_ref, cnt_acc_ref, *,
                 multiplier, k_threshold):
    """Grid = (i blocks, j blocks); j is the rank-count reduction axis."""
    j = pl.program_id(1)

    @pl.when(j == 0)
    def _init():
        cnt_acc_ref[...] = jnp.zeros_like(cnt_acc_ref)

    row = row_ref[...]                      # (1, BJ)  comparison values (lanes)
    col = col_ref[...]                      # (BI, 1)  candidate values (sublanes)
    if multiplier != 1.0:                   # fused inversion, compile-time constant
        row = row * jnp.float32(multiplier)
        col = col * jnp.float32(multiplier)

    # le[i, jj] = (work[jj] <= work[i]) for this tile; padded jj are -inf and
    # therefore never count against finite candidates (accounted in threshold).
    le = (row <= col)                       # (BI, BJ) bool

    # Rank-count reduction on the MXU (ones-matmul) instead of an XLU lane
    # reduce. bf16 0/1 mask is exact; f32 accumulation exact up to 2^24.
    ones = jnp.ones((row.shape[1], 1), jnp.bfloat16)
    cnt_acc_ref[...] += jnp.dot(le.astype(jnp.bfloat16), ones,
                                preferred_element_type=jnp.float32)

    @pl.when(j == pl.num_programs(1) - 1)
    def _finalize():
        cnt = cnt_acc_ref[...]                          # (BI, 1)
        # tail membership: work[i] >= VaR  <=>  count_le[i] >= k_threshold
        qual = cnt >= jnp.float32(k_threshold)
        psum = jnp.sum(jnp.where(qual, col, jnp.float32(0.0)))
        pcnt = jnp.sum(jnp.where(qual, jnp.float32(1.0), jnp.float32(0.0)))
        # lane-dense partial outputs (one (8,128) tile per i block)
        sum_out_ref[...] = jnp.full(sum_out_ref.shape, psum, jnp.float32)
        cnt_out_ref[...] = jnp.full(cnt_out_ref.shape, pcnt, jnp.float32)


def cvar(loss, a=0.05, inverted=False, reduction="mean", *,
         block_i=256, block_j=512):
    """Pallas-TPU CVaR. `loss` is a 1-D float32 array."""
    if reduction not in ("mean", "sum"):
        # TODO(synk): reduction='none' returns a dynamically-shaped nonzero-index
        # tensor; no fixed-shape Pallas equivalent, so it is not implemented.
        raise NotImplementedError("Only 'mean' and 'sum' reductions are supported.")
    assert block_i % 8 == 0 and block_j % 128 == 0

    loss = jnp.asarray(loss, jnp.float32)
    n = loss.shape[0]

    # Mirror the PyTorch module: empirical cdf is a float32 tensor there.
    cdf = (np.arange(n, dtype=np.float64) / n).astype(np.float32)
    k_idx = int(np.searchsorted(cdf, 1.0 - a, side="left"))
    if k_idx >= n:
        # PyTorch would raise an out-of-bounds indexing error here too (a < 1/N).
        raise IndexError("value_at_risk index out of range (need a >= 1/N).")

    multiplier = -1.0 if inverted else 1.0

    # Pad to a multiple of lcm(block_i, block_j). Padding is chosen so that,
    # AFTER the in-kernel multiplication by `multiplier`, padded entries are
    # -inf: they never enter any count threshold or the tail selection once
    # the threshold is shifted by the pad count.
    lcm = int(np.lcm(block_i, block_j))
    n_pad_total = ((n + lcm - 1) // lcm) * lcm
    pad = n_pad_total - n
    if n_pad_total >= (1 << 24):
        raise NotImplementedError("float32 rank counts are exact only below 2**24 elements.")
    pad_val = np.inf if inverted else -np.inf
    work = jnp.pad(loss, (0, pad), constant_values=pad_val) if pad else loss

    row = work.reshape(1, n_pad_total)      # comparison values, lane-dense
    col = work.reshape(n_pad_total, 1)      # candidate values, tiled (block_i, 1)

    num_i = n_pad_total // block_i
    num_j = n_pad_total // block_j
    k_threshold = float(k_idx + pad + 1)    # padded -inf entries shift the rank

    kernel = functools.partial(_cvar_kernel, multiplier=multiplier,
                               k_threshold=k_threshold)

    sums, cnts = pl.pallas_call(
        kernel,
        out_shape=(jax.ShapeDtypeStruct((num_i, 8, 128), jnp.float32),
                   jax.ShapeDtypeStruct((num_i, 8, 128), jnp.float32)),
        grid_spec=pltpu.PrefetchScalarGridSpec(
            num_scalar_prefetch=0,
            grid=(num_i, num_j),
            in_specs=[
                pl.BlockSpec((1, block_j), lambda i, j: (0, j)),
                pl.BlockSpec((block_i, 1), lambda i, j: (i, 0)),
            ],
            out_specs=[
                pl.BlockSpec((1, 8, 128), lambda i, j: (i, 0, 0)),
                pl.BlockSpec((1, 8, 128), lambda i, j: (i, 0, 0)),
            ],
            scratch_shapes=[pltpu.VMEM((block_i, 1), jnp.float32)],
        ),
        compiler_params=pltpu.CompilerParams(
            dimension_semantics=("parallel", "arbitrary"),
            vmem_limit_bytes=32 * 1024 * 1024,
        ),
    )(row, col)

    # Tiny second-stage combine of per-i-block partials.
    tail_sum = jnp.sum(sums[:, 0, 0])
    tail_cnt = jnp.sum(cnts[:, 0, 0])
    if reduction == "mean":
        risk = tail_sum / tail_cnt
    else:
        risk = tail_sum
    return (jnp.float32(multiplier) * risk).astype(jnp.float32)


def _cvar_reference(loss_np, a=0.05, inverted=False, reduction="mean"):
    """Independent NumPy reference: sort-based, mirrors the PyTorch module."""
    work = np.asarray(loss_np, np.float64).copy()
    multiplier = 1.0
    if inverted:
        work = -work
        multiplier = -1.0
    n = work.shape[0]
    cdf = (np.arange(n, dtype=np.float64) / n).astype(np.float32)
    k_idx = int(np.searchsorted(cdf, 1.0 - a, side="left"))
    var = np.sort(work, kind="stable")[k_idx]
    tail = work[work >= var]
    red = tail.mean() if reduction == "mean" else tail.sum()
    return multiplier * red


if __name__ == "__main__":
    N = 1200  # small 1-D loss vector; exercises padding and a multi-block (i, j) grid
    key = jax.random.PRNGKey(0)
    loss = jax.random.normal(key, (N,), dtype=jnp.float32)

    cases = [
        (0.05, False, "mean"),
        (0.05, False, "sum"),
        (0.10, True, "mean"),
    ]
    for a, inv, red in cases:
        out = jax.block_until_ready(cvar(loss, a=a, inverted=inv, reduction=red))
        ref = _cvar_reference(np.asarray(loss), a=a, inverted=inv, reduction=red)
        assert np.allclose(np.asarray(out), ref, rtol=1e-5, atol=1e-5), (a, inv, red, out, ref)

    print("KERNEL_OK")
</pallas_src>

<mosaic_0001>
module attributes {stable_mosaic.version = 11 : i64} {
  func.func @_cvar_kernel(%arg0: i32, %arg1: i32, %arg2: memref<1x512xf32, #tpu.memory_space<vmem>>, %arg3: memref<256x1xf32, #tpu.memory_space<vmem>>, %arg4: memref<1x8x128xf32, #tpu.memory_space<vmem>>, %arg5: memref<1x8x128xf32, #tpu.memory_space<vmem>>, %arg6: memref<256x1xf32, #tpu.memory_space<vmem>>) attributes {dimension_semantics = [#tpu.dimension_semantics<parallel>, #tpu.dimension_semantics<arbitrary>], iteration_bounds = array<i64: 6, 3>, scalar_prefetch = 0 : i64, scratch_operands = 1 : i64, tpu.core_type = #tpu.core_type<tc>, window_params = [{transform_indices = @transform_0, window_bounds = array<i64: 1, 512>}, {transform_indices = @transform_1, window_bounds = array<i64: 256, 1>}, {transform_indices = @transform_2, window_bounds = array<i64: 1, 8, 128>}, {transform_indices = @transform_3, window_bounds = array<i64: 1, 8, 128>}]} {
    %c0_i32 = arith.constant 0 : i32
    %0 = arith.cmpi eq, %arg1, %c0_i32 : i32
    %1 = arith.extui %0 : i1 to i32
    %c0_i32_0 = arith.constant 0 : i32
    %2 = arith.cmpi ne, %1, %c0_i32_0 : i32
    scf.if %2 {
      %cst_10 = arith.constant 0.000000e+00 : f32
      %19 = vector.broadcast %cst_10 : f32 to vector<256x1xf32>
      %c0_11 = arith.constant 0 : index
      %c0_12 = arith.constant 0 : index
      %20 = vector.load %arg6[%c0_11, %c0_12] : memref<256x1xf32, #tpu.memory_space<vmem>>, vector<256x1xf32>
      tpu.vector_store %arg6[%c0_11, %c0_12], %19 {strides = array<i32>} : memref<256x1xf32, #tpu.memory_space<vmem>>, vector<256x1xf32>,
    } else {
    }
    %c0 = arith.constant 0 : index
    %c0_1 = arith.constant 0 : index
    %3 = vector.load %arg2[%c0, %c0_1] : memref<1x512xf32, #tpu.memory_space<vmem>>, vector<1x512xf32>
    %c0_2 = arith.constant 0 : index
    %c0_3 = arith.constant 0 : index
    %4 = vector.load %arg3[%c0_2, %c0_3] : memref<256x1xf32, #tpu.memory_space<vmem>>, vector<256x1xf32>
    %5 = vector.broadcast %3 : vector<1x512xf32> to vector<256x512xf32>
    %6 = vector.broadcast %4 : vector<256x1xf32> to vector<256x512xf32>
    %7 = arith.cmpf ole, %5, %6 : vector<256x512xf32>
    %cst = arith.constant 1.000000e+00 : bf16
    %8 = vector.broadcast %cst : bf16 to vector<512x1xbf16>
    %c0_4 = arith.constant 0 : index
    %c0_5 = arith.constant 0 : index
    %9 = vector.load %arg6[%c0_4, %c0_5] : memref<256x1xf32, #tpu.memory_space<vmem>>, vector<256x1xf32>
    %10 = arith.extui %7 : vector<256x512xi1> to vector<256x512xi32>
    %11 = arith.sitofp %10 : vector<256x512xi32> to vector<256x512xf32>
    %12 = arith.truncf %11 : vector<256x512xf32> to vector<256x512xbf16>
    %cst_6 = arith.constant dense<0.000000e+00> : vector<256x1xf32>
    %13 = tpu.matmul %12, %8, %cst_6 {dimension_numbers = #tpu.dot_dimension_numbers<[1], [0], [0], [1], [0, 0, 1, 1], [], []>} : vector<256x512xbf16>, vector<512x1xbf16>, vector<256x1xf32> -> vector<256x1xf32>
    %14 = arith.addf %9, %13 : vector<256x1xf32>
    %c0_7 = arith.constant 0 : index
    %c0_8 = arith.constant 0 : index
    %15 = vector.load %arg6[%c0_7, %c0_8] : memref<256x1xf32, #tpu.memory_space<vmem>>, vector<256x1xf32>
    tpu.vector_store %arg6[%c0_7, %c0_8], %14 {strides = array<i32>} : memref<256x1xf32, #tpu.memory_space<vmem>>, vector<256x1xf32>,
    %c2_i32 = arith.constant 2 : i32
    %16 = arith.cmpi eq, %arg1, %c2_i32 : i32
    %17 = arith.extui %16 : i1 to i32
    %c0_i32_9 = arith.constant 0 : i32
    %18 = arith.cmpi ne, %17, %c0_i32_9 : i32
    scf.if %18 {
      %c0_10 = arith.constant 0 : index
      %c0_11 = arith.constant 0 : index
      %19 = vector.load %arg6[%c0_10, %c0_11] : memref<256x1xf32, #tpu.memory_space<vmem>>, vector<256x1xf32>
      %cst_12 = arith.constant 1.478000e+03 : f32
      %20 = vector.broadcast %cst_12 : f32 to vector<256x1xf32>
      %21 = arith.cmpf oge, %19, %20 : vector<256x1xf32>
      %cst_13 = arith.constant 0.000000e+00 : f32
      %22 = vector.broadcast %cst_13 : f32 to vector<256x1xf32>
      %23 = arith.select %21, %4, %22 : vector<256x1xi1>, vector<256x1xf32>
      %24 = vector.shape_cast %23 : vector<256x1xf32> to vector<1x256x1xf32>
      %cst_14 = arith.constant dense<0.000000e+00> : vector<1xf32>
      %25 = vector.multi_reduction <add>, %24, %cst_14 [1, 2] : vector<1x256x1xf32> to vector<1xf32>
      %26 = vector.shape_cast %25 : vector<1xf32> to vector<1x1x1xf32>
      %27 = vector.extract %26[0, 0, 0] : f32 from vector<1x1x1xf32>
      %cst_15 = arith.constant 1.000000e+00 : f32
      %cst_16 = arith.constant 0.000000e+00 : f32
      %28 = vector.broadcast %cst_15 : f32 to vector<256x1xf32>
      %29 = vector.broadcast %cst_16 : f32 to vector<256x1xf32>
      %30 = arith.select %21, %28, %29 : vector<256x1xi1>, vector<256x1xf32>
      %31 = vector.shape_cast %30 : vector<256x1xf32> to vector<1x256x1xf32>
      %cst_17 = arith.constant dense<0.000000e+00> : vector<1xf32>
      %32 = vector.multi_reduction <add>, %31, %cst_17 [1, 2] : vector<1x256x1xf32> to vector<1xf32>
      %33 = vector.shape_cast %32 : vector<1xf32> to vector<1x1x1xf32>
      %34 = vector.extract %33[0, 0, 0] : f32 from vector<1x1x1xf32>
      %35 = vector.broadcast %27 : f32 to vector<1x8x128xf32>
      %c0_18 = arith.constant 0 : index
      %c0_19 = arith.constant 0 : index
      %c0_20 = arith.constant 0 : index
      %36 = vector.load %arg4[%c0_18, %c0_19, %c0_20] : memref<1x8x128xf32, #tpu.memory_space<vmem>>, vector<1x8x128xf32>
      tpu.vector_store %arg4[%c0_18, %c0_19, %c0_20], %35 {strides = array<i32>} : memref<1x8x128xf32, #tpu.memory_space<vmem>>, vector<1x8x128xf32>,
      %37 = vector.broadcast %34 : f32 to vector<1x8x128xf32>
      %c0_21 = arith.constant 0 : index
      %c0_22 = arith.constant 0 : index
      %c0_23 = arith.constant 0 : index
      %38 = vector.load %arg5[%c0_21, %c0_22, %c0_23] : memref<1x8x128xf32, #tpu.memory_space<vmem>>, vector<1x8x128xf32>
      tpu.vector_store %arg5[%c0_21, %c0_22, %c0_23], %37 {strides = array<i32>} : memref<1x8x128xf32, #tpu.memory_space<vmem>>, vector<1x8x128xf32>,
    } else {
    }
    return
  }
  func.func @transform_0(%arg0: i32, %arg1: i32) -> (i32, i32) {
    %c0_i32 = arith.constant 0 : i32
    %c0_i32_0 = arith.constant 0 : i32
    return %c0_i32, %arg1 : i32, i32
  }
  func.func @transform_1(%arg0: i32, %arg1: i32) -> (i32, i32) {
    %c0_i32 = arith.constant 0 : i32
    %c0_i32_0 = arith.constant 0 : i32
    return %arg0, %c0_i32 : i32, i32
  }
  func.func @transform_2(%arg0: i32, %arg1: i32) -> (i32, i32, i32) {
    %c0_i32 = arith.constant 0 : i32
    %c0_i32_0 = arith.constant 0 : i32
    %c0_i32_1 = arith.constant 0 : i32
    return %arg0, %c0_i32, %c0_i32_0 : i32, i32, i32
  }
  func.func @transform_3(%arg0: i32, %arg1: i32) -> (i32, i32, i32) {
    %c0_i32 = arith.constant 0 : i32
    %c0_i32_0 = arith.constant 0 : i32
    %c0_i32_1 = arith.constant 0 : i32
    return %arg0, %c0_i32, %c0_i32_0 : i32, i32, i32
  }
}

</mosaic_0001>

<llo_original>
// kernel: tpu_custom_call.1
$region0: #{tpu_custom_call.1}
  #allocation0 [shape = 'u32[]', space=smem, size = 0x4, offset = 0x4, fixed_abs, tag = 'smem constant byte address 0x4 - core index']
  #allocation1 [shape = 'u32[72,128]{1,0:T(1,128)}', space=vmem, size = 0x9000, scoped, tag = 'internal scratch']
  #allocation2 [shape = 'f32[256,1]{1,0:T(8,128)}', space=vmem, size = 0x20000, scoped, tag = 'scratch operand']
  %s0 = inlined_call_operand.vmem [shape: f32[1,1536], index: 0, kind: input, shape index: {}]
  %s1 = inlined_call_operand.vmem [shape: f32[1536,1], index: 1, kind: input, shape index: {}]
  %s2 = inlined_call_operand.hbm [shape: f32[6,8,128], index: 2, kind: output, shape index: {0}]
  %s3 = inlined_call_operand.hbm [shape: f32[6,8,128], index: 3, kind: output, shape index: {1}]
  %4 = xla_tuple %s2, %s3
  %s5 = sld [smem:[#allocation0]]
  $region57: #{tpu_custom_call.1} parent=0
    _
  %s7 = ssub.s32 1, %s5
  %s8 = scalar_select 0, %s7, %s5
  $region1: #{tpu_custom_call.1} parent=0
    #allocation3 [shape = 'u8[8192]{0}', space=vmem, size = 0x2000, scoped, tag = 'output window, operand 0']
    #allocation4 [shape = 's32[2]{0}', space=sflag, size = 0x8, scoped, tag = 'scoped memory for tpu_custom_call.1']
    #allocation5 [shape = 'u8[8192]{0}', space=vmem, size = 0x2000, scoped, tag = 'output window, operand 1']
    #allocation6 [shape = 's32[2]{0}', space=sflag, size = 0x8, scoped, tag = 'scoped memory for tpu_custom_call.1']
    %9 = vsyncpa [#allocation4], 0
    %s10 = scalar_lea.sflag [#allocation4], 1
    %11 = vsyncpa %s10, 0
    %12 = vsyncpa [#allocation6], 0
    %s13 = scalar_lea.sflag [#allocation6], 1
    %14 = vsyncpa %s13, 0
    loop: start=0, step=1, limit=20
    $region2: #{tpu_custom_call.1} parent=1 // loop_pre_header
      _
    $region3: #{tpu_custom_call.1} parent=1 // loop_header
      %s16 = sphi 0, %s20
      %p17 = scmp.ge.s32.totalorder %s16, 20
      %s23 = sphi 0, %s35
      %s24 = sphi 0, %s31
      %s25 = sphi 0, %s23
      %s26 = sphi 0, %s24
      %s27 = sphi 0, %s25
      %s28 = sphi 0, %s26
      %s38 = sphi 0, %s40
      %s41 = sphi 0, %s38
      %s42 = sphi 0, %s41
      %s58 = sphi 0, %s42
      %s64 = sphi 0, %s66
      %s67 = sphi 0, %s64
      %s68 = sphi 0, %s67
      %s84 = sphi 0, %s68
      %s90 = sphi 0, %s92
      %s93 = sphi 0, %s90
      %s94 = sphi 0, %s93
      %s110 = sphi 0, %s94
      %s116 = sphi 0, %s118
      %s119 = sphi 0, %s116
      %s120 = sphi 0, %s119
      %s136 = sphi 0, %s120
    $region4: #{tpu_custom_call.1} parent=1 // loop_header_branch
      %19 = sbr.rel (%p17) target = $region8
    $region5: #{tpu_custom_call.1} parent=1 // loop_body
      %s21 = ssub.s32 %s16, 1
      %s22 = ssub.s32 %s16, 2
      %s29 = sadd.s32 1, %s24
      %p30 = scmp.ge.s32.totalorder %s29, 3
      %s31 = scalar_select %p30, 0, %s29
      %s32 = sadd.s32 1, %s23
      %s33 = scalar_select %p30, %s32, %s23
      %p34 = scmp.ge.s32.totalorder %s33, 6
      %s35 = scalar_select %p34, 0, %s33
      %s36 = ssub.s32 %s24, %s31
      %p37 = scmp.eq.s32.totalorder %s36, 0
      %s39 = sadd.s32 %s38, 1
      %s40 = scalar_select %p37, %s38, %s39
      %p43 = pneg %p37
      %p44 = scmp.eq.s32.totalorder %s16, 17
      %p45 = por %p43, %p44
      %p46 = scmp.ne.s32.totalorder %s38, %s41
      %p47 = scmp.eq.s32.totalorder %s16, 0
      %p48 = por %p46, %p47
      %p49 = scmp.ne.s32.totalorder %s38, %s41
      %p50 = scmp.eq.s32.totalorder %s21, 17
      %p51 = por %p49, %p50
      %p52 = scmp.ne.s32.totalorder %s41, %s42
      %p53 = scmp.eq.s32.totalorder %s21, 0
      %p54 = por %p52, %p53
      %p55 = scmp.ne.s32.totalorder %s41, %s42
      %p56 = scmp.eq.s32.totalorder %s22, 17
      %p57 = por %p55, %p56
      %p59 = scmp.ne.s32.totalorder %s42, %s58
      %p60 = scmp.eq.s32.totalorder %s22, 0
      %p61 = por %p59, %p60
      %s62 = ssub.s32 %s23, %s35
      %p63 = scmp.eq.s32.totalorder %s62, 0
      %s65 = sadd.s32 %s64, 1
      %s66 = scalar_select %p63, %s64, %s65
      %p69 = pneg %p63
      %p70 = scmp.eq.s32.totalorder %s16, 17
      %p71 = por %p69, %p70
      %p72 = scmp.ne.s32.totalorder %s64, %s67
      %p73 = scmp.eq.s32.totalorder %s16, 0
      %p74 = por %p72, %p73
      %p75 = scmp.ne.s32.totalorder %s64, %s67
      %p76 = scmp.eq.s32.totalorder %s21, 17
      %p77 = por %p75, %p76
      %p78 = scmp.ne.s32.totalorder %s67, %s68
      %p79 = scmp.eq.s32.totalorder %s21, 0
      %p80 = por %p78, %p79
      %p81 = scmp.ne.s32.totalorder %s67, %s68
      %p82 = scmp.eq.s32.totalorder %s22, 17
      %p83 = por %p81, %p82
      %p85 = scmp.ne.s32.totalorder %s68, %s84
      %p86 = scmp.eq.s32.totalorder %s22, 0
      %p87 = por %p85, %p86
      %s88 = ssub.s32 %s23, %s35
      %p89 = scmp.eq.s32.totalorder %s88, 0
      %s91 = sadd.s32 %s90, 1
      %s92 = scalar_select %p89, %s90, %s91
      %p95 = pneg %p89
      %p96 = scmp.eq.s32.totalorder %s16, 17
      %p97 = por %p95, %p96
      %p98 = scmp.ne.s32.totalorder %s90, %s93
      %p99 = scmp.eq.s32.totalorder %s16, 0
      %p100 = por %p98, %p99
      %p101 = scmp.ne.s32.totalorder %s90, %s93
      %p102 = scmp.eq.s32.totalorder %s21, 17
      %p103 = por %p101, %p102
      %p104 = scmp.ne.s32.totalorder %s93, %s94
      %p105 = scmp.eq.s32.totalorder %s21, 0
      %p106 = por %p104, %p105
      %p107 = scmp.ne.s32.totalorder %s93, %s94
      %p108 = scmp.eq.s32.totalorder %s22, 17
      %p109 = por %p107, %p108
      %p111 = scmp.ne.s32.totalorder %s94, %s110
      %p112 = scmp.eq.s32.totalorder %s22, 0
      %p113 = por %p111, %p112
      %s114 = ssub.s32 %s23, %s35
      %p115 = scmp.eq.s32.totalorder %s114, 0
      %s117 = sadd.s32 %s116, 1
      %s118 = scalar_select %p115, %s116, %s117
      %p121 = pneg %p115
      %p122 = scmp.eq.s32.totalorder %s16, 17
      %p123 = por %p121, %p122
      %p124 = scmp.ne.s32.totalorder %s116, %s119
      %p125 = scmp.eq.s32.totalorder %s16, 0
      %p126 = por %p124, %p125
      %p127 = scmp.ne.s32.totalorder %s116, %s119
      %p128 = scmp.eq.s32.totalorder %s21, 17
      %p129 = por %p127, %p128
      %p130 = scmp.ne.s32.totalorder %s119, %s120
      %p131 = scmp.eq.s32.totalorder %s21, 0
      %p132 = por %p130, %p131
      %p133 = scmp.ne.s32.totalorder %s119, %s120
      %p134 = scmp.eq.s32.totalorder %s22, 17
      %p135 = por %p133, %p134
      %p137 = scmp.ne.s32.totalorder %s120, %s136
      %p138 = scmp.eq.s32.totalorder %s22, 0
      %p139 = por %p137, %p138
      %p140 = scmp.le.s32.totalorder 1, %s16
      %p141 = scmp.lt.s32.totalorder %s16, 19
      %p142 = pnand %p140, %p141
      %p143 = pneg %p142
      // Predicated region
      $region9: #{tpu_custom_call.1} parent=5 // pred_check
        _
      $region10: #{tpu_custom_call.1} parent=5 // pred_check_branch
        %145 = sbr.rel (%p142) target = $region12
      $region11: #{tpu_custom_call.1} parent=5 // pred_region
        %s146 = ssub.s32 %s16, 1
      $region12: #{tpu_custom_call.1} parent=5 // pred_fallthru
        _
      %p147 = scmp.lt.s32.totalorder %s16, 18
      // Predicated region
      $region13: #{tpu_custom_call.1} parent=5 // pred_check
        %p148 = pneg %p147
      $region14: #{tpu_custom_call.1} parent=5 // pred_check_branch
        %150 = sbr.rel (%p148) target = $region16
      $region15: #{tpu_custom_call.1} parent=5 // pred_region
        // Predicated region
        $region17: #{tpu_custom_call.1} parent=15 // pred_check
          %p151 = pneg %p48
        $region18: #{tpu_custom_call.1} parent=15 // pred_check_branch
          %153 = sbr.rel (%p151) target = $region20
        $region19: #{tpu_custom_call.1} parent=15 // pred_region
          %s154 = smul.u32 4, %s24
          %p155 = scmp.lt.s32.totalorder %s154, 11
          %s156 = scalar_select %p155, %s154, 11
          %s157 = scalar_lea.vmem %s0, %s156
          %s158 = smul.u32 4, %s24
        $region20: #{tpu_custom_call.1} parent=15 // pred_fallthru
          _
        // Predicated region
        $region21: #{tpu_custom_call.1} parent=15 // pred_check
          %p159 = pneg %p74
        $region22: #{tpu_custom_call.1} parent=15 // pred_check_branch
          %161 = sbr.rel (%p159) target = $region24
        $region23: #{tpu_custom_call.1} parent=15 // pred_region
          %s162 = smul.u32 32, %s23
          %p163 = scmp.lt.s32.totalorder %s162, 191
          %s164 = scalar_select %p163, %s162, 191
          %s165 = smul.addr %s164, 8
          %s166 = scalar_lea.vmem %s1, %s165
          %s167 = smul.u32 32, %s23
        $region24: #{tpu_custom_call.1} parent=15 // pred_fallthru
          _
      $region16: #{tpu_custom_call.1} parent=5 // pred_fallthru
        _
      %p168 = scmp.le.s32.totalorder 1, %s16
      %p169 = scmp.lt.s32.totalorder %s16, 19
      %p170 = pnand %p168, %p169
      %p171 = pneg %p170
      // Predicated region
      $region25: #{tpu_custom_call.1} parent=5 // pred_check
        _
      $region26: #{tpu_custom_call.1} parent=5 // pred_check_branch
        %173 = sbr.rel (%p170) target = $region28
      $region27: #{tpu_custom_call.1} parent=5 // pred_region
        %s174 = ssub.s32 %s16, 1
        %s175 = smul.u32 4, %s26
        %p176 = scmp.lt.s32.totalorder %s175, 11
        %s177 = scalar_select %p176, %s175, 11
        %s178 = scalar_lea.vmem %s0, %s177
        %p179 = pneg %p54
        %p180 = pneg %p51
        %s181 = smul.u32 32, %s25
        %p182 = scmp.lt.s32.totalorder %s181, 191
        %s183 = scalar_select %p182, %s181, 191
        %s184 = smul.addr %s183, 8
        %s185 = scalar_lea.vmem %s1, %s184
        %p186 = pneg %p80
        %p187 = pneg %p77
        %p188 = pneg %p106
        %p189 = pneg %p103
        %s190 = sand.u32 %s93, 1
        %s191 = scalar_lea.sflag [#allocation4], %s190
        %s192 = sand.u32 %s93, 1
        %s193 = smul.addr %s192, 8
        %s194 = scalar_lea.vmem [#allocation3], %s193
        %p195 = pneg %p132
        %p196 = pneg %p129
        %s197 = sand.u32 %s119, 1
        %s198 = scalar_lea.sflag [#allocation6], %s197
        %s199 = sand.u32 %s119, 1
        %s200 = smul.addr %s199, 8
        %s201 = scalar_lea.vmem [#allocation5], %s200
        %s202 = smul.u32 4, %s26
        %p203 = scmp.lt.s32.totalorder %s202, 11
        %s204 = scalar_select %p203, %s202, 11
        %s205 = scalar_lea.vmem %s0, %s204
        %s206 = smul.u32 4, %s26
        %s207 = smul.u32 32, %s25
        %p208 = scmp.lt.s32.totalorder %s207, 191
        %s209 = scalar_select %p208, %s207, 191
        %s210 = smul.addr %s209, 8
        %s211 = scalar_lea.vmem %s1, %s210
        %s212 = smul.u32 32, %s25
        %p214 = scmp.eq.s32.totalorder %s26, 0
        // Predicated region
        $region29: #{tpu_custom_call.1} parent=27 // pred_check
          %p215 = pneg %p214
        $region30: #{tpu_custom_call.1} parent=27 // pred_check_branch
          %217 = sbr.rel (%p215) target = $region32
        $region31: #{tpu_custom_call.1} parent=27 // pred_region
          %vm218 = vcmask 7168
          %219 = vst.msk [vmem:[#allocation2] sm:$0xff] %vm218, 0.0
          %220 = vst.msk [vmem:[#allocation2 + $0x8] sm:$0xff] %vm218, 0.0
          %221 = vst.msk [vmem:[#allocation2 + $0x10] sm:$0xff] %vm218, 0.0
          %222 = vst.msk [vmem:[#allocation2 + $0x18] sm:$0xff] %vm218, 0.0
          %223 = vst.msk [vmem:[#allocation2 + $0x20] sm:$0xff] %vm218, 0.0
          %224 = vst.msk [vmem:[#allocation2 + $0x28] sm:$0xff] %vm218, 0.0
          %225 = vst.msk [vmem:[#allocation2 + $0x30] sm:$0xff] %vm218, 0.0
          %226 = vst.msk [vmem:[#allocation2 + $0x38] sm:$0xff] %vm218, 0.0
          %227 = vst.msk [vmem:[#allocation2 + $0x40] sm:$0xff] %vm218, 0.0
          %228 = vst.msk [vmem:[#allocation2 + $0x48] sm:$0xff] %vm218, 0.0
          %229 = vst.msk [vmem:[#allocation2 + $0x50] sm:$0xff] %vm218, 0.0
          %230 = vst.msk [vmem:[#allocation2 + $0x58] sm:$0xff] %vm218, 0.0
          %231 = vst.msk [vmem:[#allocation2 + $0x60] sm:$0xff] %vm218, 0.0
          %232 = vst.msk [vmem:[#allocation2 + $0x68] sm:$0xff] %vm218, 0.0
          %233 = vst.msk [vmem:[#allocation2 + $0x70] sm:$0xff] %vm218, 0.0
          %234 = vst.msk [vmem:[#allocation2 + $0x78] sm:$0xff] %vm218, 0.0
          %235 = vst.msk [vmem:[#allocation2 + $0x80] sm:$0xff] %vm218, 0.0
          %236 = vst.msk [vmem:[#allocation2 + $0x88] sm:$0xff] %vm218, 0.0
          %237 = vst.msk [vmem:[#allocation2 + $0x90] sm:$0xff] %vm218, 0.0
          %238 = vst.msk [vmem:[#allocation2 + $0x98] sm:$0xff] %vm218, 0.0
          %239 = vst.msk [vmem:[#allocation2 + $0xa0] sm:$0xff] %vm218, 0.0
          %240 = vst.msk [vmem:[#allocation2 + $0xa8] sm:$0xff] %vm218, 0.0
          %241 = vst.msk [vmem:[#allocation2 + $0xb0] sm:$0xff] %vm218, 0.0
          %242 = vst.msk [vmem:[#allocation2 + $0xb8] sm:$0xff] %vm218, 0.0
          %243 = vst.msk [vmem:[#allocation2 + $0xc0] sm:$0xff] %vm218, 0.0
          %244 = vst.msk [vmem:[#allocation2 + $0xc8] sm:$0xff] %vm218, 0.0
          %245 = vst.msk [vmem:[#allocation2 + $0xd0] sm:$0xff] %vm218, 0.0
          %246 = vst.msk [vmem:[#allocation2 + $0xd8] sm:$0xff] %vm218, 0.0
          %247 = vst.msk [vmem:[#allocation2 + $0xe0] sm:$0xff] %vm218, 0.0
          %248 = vst.msk [vmem:[#allocation2 + $0xe8] sm:$0xff] %vm218, 0.0
          %249 = vst.msk [vmem:[#allocation2 + $0xf0] sm:$0xff] %vm218, 0.0
          %250 = vst.msk [vmem:[#allocation2 + $0xf8] sm:$0xff] %vm218, 0.0
        $region32: #{tpu_custom_call.1} parent=27 // pred_fallthru
          _
        %v251 = vld [vmem:[%s205] sm:$0xf]
        %v252 = vld [vmem:[%s211] sm:$0xff]
        %v253 = vld [vmem:[%s211 + $0x8] sm:$0xff]
        %v254 = vld [vmem:[%s211 + $0x10] sm:$0xff]
        %v255 = vld [vmem:[%s211 + $0x18] sm:$0xff]
        %v256 = vld [vmem:[%s211 + $0x20] sm:$0xff]
        %v257 = vld [vmem:[%s211 + $0x28] sm:$0xff]
        %v258 = vld [vmem:[%s211 + $0x30] sm:$0xff]
        %v259 = vld [vmem:[%s211 + $0x38] sm:$0xff]
        %v260 = vld [vmem:[%s211 + $0x40] sm:$0xff]
        %v261 = vld [vmem:[%s211 + $0x48] sm:$0xff]
        %v262 = vld [vmem:[%s211 + $0x50] sm:$0xff]
        %v263 = vld [vmem:[%s211 + $0x58] sm:$0xff]
        %v264 = vld [vmem:[%s211 + $0x60] sm:$0xff]
        %v265 = vld [vmem:[%s211 + $0x68] sm:$0xff]
        %v266 = vld [vmem:[%s211 + $0x70] sm:$0xff]
        %v267 = vld [vmem:[%s211 + $0x78] sm:$0xff]
        %v268 = vld [vmem:[%s211 + $0x80] sm:$0xff]
        %v269 = vld [vmem:[%s211 + $0x88] sm:$0xff]
        %v270 = vld [vmem:[%s211 + $0x90] sm:$0xff]
        %v271 = vld [vmem:[%s211 + $0x98] sm:$0xff]
        %v272 = vld [vmem:[%s211 + $0xa0] sm:$0xff]
        %v273 = vld [vmem:[%s211 + $0xa8] sm:$0xff]
        %v274 = vld [vmem:[%s211 + $0xb0] sm:$0xff]
        %v275 = vld [vmem:[%s211 + $0xb8] sm:$0xff]
        %v276 = vld [vmem:[%s211 + $0xc0] sm:$0xff]
        %v277 = vld [vmem:[%s211 + $0xc8] sm:$0xff]
        %v278 = vld [vmem:[%s211 + $0xd0] sm:$0xff]
        %v279 = vld [vmem:[%s211 + $0xd8] sm:$0xff]
        %v280 = vld [vmem:[%s211 + $0xe0] sm:$0xff]
        %v281 = vld [vmem:[%s211 + $0xe8] sm:$0xff]
        %v282 = vld [vmem:[%s211 + $0xf0] sm:$0xff]
        %v283 = vld [vmem:[%s211 + $0xf8] sm:$0xff]
        %v285 = vperm.slane %v251, 0
        %v286 = vperm.slane %v251, 1
        %v287 = vperm.slane %v251, 2
        %v288 = vperm.slane %v251, 3
        %294 = vset.pattern.permute.xlu0 0
        %295 = vperm.xlu0 %294, %v252
        %v296 = vpop.permute.xlu0 %295
        %299 = vset.pattern.permute.xlu0 0
        %300 = vperm.xlu0 %299, %v253
        %v301 = vpop.permute.xlu0 %300
        %304 = vset.pattern.permute.xlu0 0
        %305 = vperm.xlu0 %304, %v254
        %v306 = vpop.permute.xlu0 %305
        %309 = vset.pattern.permute.xlu0 0
        %310 = vperm.xlu0 %309, %v255
        %v311 = vpop.permute.xlu0 %310
        %314 = vset.pattern.permute.xlu0 0
        %315 = vperm.xlu0 %314, %v256
        %v316 = vpop.permute.xlu0 %315
        %319 = vset.pattern.permute.xlu0 0
        %320 = vperm.xlu0 %319, %v257
        %v321 = vpop.permute.xlu0 %320
        %324 = vset.pattern.permute.xlu0 0
        %325 = vperm.xlu0 %324, %v258
        %v326 = vpop.permute.xlu0 %325
        %329 = vset.pattern.permute.xlu0 0
        %330 = vperm.xlu0 %329, %v259
        %v331 = vpop.permute.xlu0 %330
        %334 = vset.pattern.permute.xlu0 0
        %335 = vperm.xlu0 %334, %v260
        %v336 = vpop.permute.xlu0 %335
        %339 = vset.pattern.permute.xlu0 0
        %340 = vperm.xlu0 %339, %v261
        %v341 = vpop.permute.xlu0 %340
        %344 = vset.pattern.permute.xlu0 0
        %345 = vperm.xlu0 %344, %v262
        %v346 = vpop.permute.xlu0 %345
        %349 = vset.pattern.permute.xlu0 0
        %350 = vperm.xlu0 %349, %v263
        %v351 = vpop.permute.xlu0 %350
        %354 = vset.pattern.permute.xlu0 0
        %355 = vperm.xlu0 %354, %v264
        %v356 = vpop.permute.xlu0 %355
        %359 = vset.pattern.permute.xlu0 0
        %360 = vperm.xlu0 %359, %v265
        %v361 = vpop.permute.xlu0 %360
        %364 = vset.pattern.permute.xlu0 0
        %365 = vperm.xlu0 %364, %v266
        %v366 = vpop.permute.xlu0 %365
        %369 = vset.pattern.permute.xlu0 0
        %370 = vperm.xlu0 %369, %v267
        %v371 = vpop.permute.xlu0 %370
        %374 = vset.pattern.permute.xlu0 0
        %375 = vperm.xlu0 %374, %v268
        %v376 = vpop.permute.xlu0 %375
        %379 = vset.pattern.permute.xlu0 0
        %380 = vperm.xlu0 %379, %v269
        %v381 = vpop.permute.xlu0 %380
        %384 = vset.pattern.permute.xlu0 0
        %385 = vperm.xlu0 %384, %v270
        %v386 = vpop.permute.xlu0 %385
        %389 = vset.pattern.permute.xlu0 0
        %390 = vperm.xlu0 %389, %v271
        %v391 = vpop.permute.xlu0 %390
        %394 = vset.pattern.permute.xlu0 0
        %395 = vperm.xlu0 %394, %v272
        %v396 = vpop.permute.xlu0 %395
        %399 = vset.pattern.permute.xlu0 0
        %400 = vperm.xlu0 %399, %v273
        %v401 = vpop.permute.xlu0 %400
        %404 = vset.pattern.permute.xlu0 0
        %405 = vperm.xlu0 %404, %v274
        %v406 = vpop.permute.xlu0 %405
        %409 = vset.pattern.permute.xlu0 0
        %410 = vperm.xlu0 %409, %v275
        %v411 = vpop.permute.xlu0 %410
        %414 = vset.pattern.permute.xlu0 0
        %415 = vperm.xlu0 %414, %v276
        %v416 = vpop.permute.xlu0 %415
        %419 = vset.pattern.permute.xlu0 0
        %420 = vperm.xlu0 %419, %v277
        %v421 = vpop.permute.xlu0 %420
        %424 = vset.pattern.permute.xlu0 0
        %425 = vperm.xlu0 %424, %v278
        %v426 = vpop.permute.xlu0 %425
        %429 = vset.pattern.permute.xlu0 0
        %430 = vperm.xlu0 %429, %v279
        %v431 = vpop.permute.xlu0 %430
        %434 = vset.pattern.permute.xlu0 0
        %435 = vperm.xlu0 %434, %v280
        %v436 = vpop.permute.xlu0 %435
        %439 = vset.pattern.permute.xlu0 0
        %440 = vperm.xlu0 %439, %v281
        %v441 = vpop.permute.xlu0 %440
        %444 = vset.pattern.permute.xlu0 0
        %445 = vperm.xlu0 %444, %v282
        %v446 = vpop.permute.xlu0 %445
        %449 = vset.pattern.permute.xlu0 0
        %450 = vperm.xlu0 %449, %v283
        %v451 = vpop.permute.xlu0 %450
        %vm453 = vcmp.le.f32.partialorder %v285, %v296
        %vm454 = vcmp.le.f32.partialorder %v286, %v296
        %vm455 = vcmp.le.f32.partialorder %v287, %v296
        %vm456 = vcmp.le.f32.partialorder %v288, %v296
        %vm457 = vcmp.le.f32.partialorder %v285, %v301
        %vm458 = vcmp.le.f32.partialorder %v286, %v301
        %vm459 = vcmp.le.f32.partialorder %v287, %v301
        %vm460 = vcmp.le.f32.partialorder %v288, %v301
        %vm461 = vcmp.le.f32.partialorder %v285, %v306
        %vm462 = vcmp.le.f32.partialorder %v286, %v306
        %vm463 = vcmp.le.f32.partialorder %v287, %v306
        %vm464 = vcmp.le.f32.partialorder %v288, %v306
        %vm465 = vcmp.le.f32.partialorder %v285, %v311
        %vm466 = vcmp.le.f32.partialorder %v286, %v311
        %vm467 = vcmp.le.f32.partialorder %v287, %v311
        %vm468 = vcmp.le.f32.partialorder %v288, %v311
        %vm469 = vcmp.le.f32.partialorder %v285, %v316
        %vm470 = vcmp.le.f32.partialorder %v286, %v316
        %vm471 = vcmp.le.f32.partialorder %v287, %v316
        %vm472 = vcmp.le.f32.partialorder %v288, %v316
        %vm473 = vcmp.le.f32.partialorder %v285, %v321
        %vm474 = vcmp.le.f32.partialorder %v286, %v321
        %vm475 = vcmp.le.f32.partialorder %v287, %v321
        %vm476 = vcmp.le.f32.partialorder %v288, %v321
        %vm477 = vcmp.le.f32.partialorder %v285, %v326
        %vm478 = vcmp.le.f32.partialorder %v286, %v326
        %vm479 = vcmp.le.f32.partialorder %v287, %v326
        %vm480 = vcmp.le.f32.partialorder %v288, %v326
        %vm481 = vcmp.le.f32.partialorder %v285, %v331
        %vm482 = vcmp.le.f32.partialorder %v286, %v331
        %vm483 = vcmp.le.f32.partialorder %v287, %v331
        %vm484 = vcmp.le.f32.partialorder %v288, %v331
        %vm485 = vcmp.le.f32.partialorder %v285, %v336
        %vm486 = vcmp.le.f32.partialorder %v286, %v336
        %vm487 = vcmp.le.f32.partialorder %v287, %v336
        %vm488 = vcmp.le.f32.partialorder %v288, %v336
        %vm489 = vcmp.le.f32.partialorder %v285, %v341
        %vm490 = vcmp.le.f32.partialorder %v286, %v341
        %vm491 = vcmp.le.f32.partialorder %v287, %v341
        %vm492 = vcmp.le.f32.partialorder %v288, %v341
        %vm493 = vcmp.le.f32.partialorder %v285, %v346
        %vm494 = vcmp.le.f32.partialorder %v286, %v346
        %vm495 = vcmp.le.f32.partialorder %v287, %v346
        %vm496 = vcmp.le.f32.partialorder %v288, %v346
        %vm497 = vcmp.le.f32.partialorder %v285, %v351
        %vm498 = vcmp.le.f32.partialorder %v286, %v351
        %vm499 = vcmp.le.f32.partialorder %v287, %v351
        %vm500 = vcmp.le.f32.partialorder %v288, %v351
        %vm501 = vcmp.le.f32.partialorder %v285, %v356
        %vm502 = vcmp.le.f32.partialorder %v286, %v356
        %vm503 = vcmp.le.f32.partialorder %v287, %v356
        %vm504 = vcmp.le.f32.partialorder %v288, %v356
        %vm505 = vcmp.le.f32.partialorder %v285, %v361
        %vm506 = vcmp.le.f32.partialorder %v286, %v361
        %vm507 = vcmp.le.f32.partialorder %v287, %v361
        %vm508 = vcmp.le.f32.partialorder %v288, %v361
        %vm509 = vcmp.le.f32.partialorder %v285, %v366
        %vm510 = vcmp.le.f32.partialorder %v286, %v366
        %vm511 = vcmp.le.f32.partialorder %v287, %v366
        %vm512 = vcmp.le.f32.partialorder %v288, %v366
        %vm513 = vcmp.le.f32.partialorder %v285, %v371
        %vm514 = vcmp.le.f32.partialorder %v286, %v371
        %vm515 = vcmp.le.f32.partialorder %v287, %v371
        %vm516 = vcmp.le.f32.partialorder %v288, %v371
        %vm517 = vcmp.le.f32.partialorder %v285, %v376
        %vm518 = vcmp.le.f32.partialorder %v286, %v376
        %vm519 = vcmp.le.f32.partialorder %v287, %v376
        %vm520 = vcmp.le.f32.partialorder %v288, %v376
        %vm521 = vcmp.le.f32.partialorder %v285, %v381
        %vm522 = vcmp.le.f32.partialorder %v286, %v381
        %vm523 = vcmp.le.f32.partialorder %v287, %v381
        %vm524 = vcmp.le.f32.partialorder %v288, %v381
        %vm525 = vcmp.le.f32.partialorder %v285, %v386
        %vm526 = vcmp.le.f32.partialorder %v286, %v386
        %vm527 = vcmp.le.f32.partialorder %v287, %v386
        %vm528 = vcmp.le.f32.partialorder %v288, %v386
        %vm529 = vcmp.le.f32.partialorder %v285, %v391
        %vm530 = vcmp.le.f32.partialorder %v286, %v391
        %vm531 = vcmp.le.f32.partialorder %v287, %v391
        %vm532 = vcmp.le.f32.partialorder %v288, %v391
        %vm533 = vcmp.le.f32.partialorder %v285, %v396
        %vm534 = vcmp.le.f32.partialorder %v286, %v396
        %vm535 = vcmp.le.f32.partialorder %v287, %v396
        %vm536 = vcmp.le.f32.partialorder %v288, %v396
        %vm537 = vcmp.le.f32.partialorder %v285, %v401
        %vm538 = vcmp.le.f32.partialorder %v286, %v401
        %vm539 = vcmp.le.f32.partialorder %v287, %v401
        %vm540 = vcmp.le.f32.partialorder %v288, %v401
        %vm541 = vcmp.le.f32.partialorder %v285, %v406
        %vm542 = vcmp.le.f32.partialorder %v286, %v406
        %vm543 = vcmp.le.f32.partialorder %v287, %v406
        %vm544 = vcmp.le.f32.partialorder %v288, %v406
        %vm545 = vcmp.le.f32.partialorder %v285, %v411
        %vm546 = vcmp.le.f32.partialorder %v286, %v411
        %vm547 = vcmp.le.f32.partialorder %v287, %v411
        %vm548 = vcmp.le.f32.partialorder %v288, %v411
        %vm549 = vcmp.le.f32.partialorder %v285, %v416
        %vm550 = vcmp.le.f32.partialorder %v286, %v416
        %vm551 = vcmp.le.f32.partialorder %v287, %v416
        %vm552 = vcmp.le.f32.partialorder %v288, %v416
        %vm553 = vcmp.le.f32.partialorder %v285, %v421
        %vm554 = vcmp.le.f32.partialorder %v286, %v421
        %vm555 = vcmp.le.f32.partialorder %v287, %v421
        %vm556 = vcmp.le.f32.partialorder %v288, %v421
        %vm557 = vcmp.le.f32.partialorder %v285, %v426
        %vm558 = vcmp.le.f32.partialorder %v286, %v426
        %vm559 = vcmp.le.f32.partialorder %v287, %v426
        %vm560 = vcmp.le.f32.partialorder %v288, %v426
        %vm561 = vcmp.le.f32.partialorder %v285, %v431
        %vm562 = vcmp.le.f32.partialorder %v286, %v431
        %vm563 = vcmp.le.f32.partialorder %v287, %v431
        %vm564 = vcmp.le.f32.partialorder %v288, %v431
        %vm565 = vcmp.le.f32.partialorder %v285, %v436
        %vm566 = vcmp.le.f32.partialorder %v286, %v436
        %vm567 = vcmp.le.f32.partialorder %v287, %v436
        %vm568 = vcmp.le.f32.partialorder %v288, %v436
        %vm569 = vcmp.le.f32.partialorder %v285, %v441
        %vm570 = vcmp.le.f32.partialorder %v286, %v441
        %vm571 = vcmp.le.f32.partialorder %v287, %v441
        %vm572 = vcmp.le.f32.partialorder %v288, %v441
        %vm573 = vcmp.le.f32.partialorder %v285, %v446
        %vm574 = vcmp.le.f32.partialorder %v286, %v446
        %vm575 = vcmp.le.f32.partialorder %v287, %v446
        %vm576 = vcmp.le.f32.partialorder %v288, %v446
        %vm577 = vcmp.le.f32.partialorder %v285, %v451
        %vm578 = vcmp.le.f32.partialorder %v286, %v451
        %vm579 = vcmp.le.f32.partialorder %v287, %v451
        %vm580 = vcmp.le.f32.partialorder %v288, %v451
        %v581 = vld [vmem:[#allocation2] sm:$0xff]
        %v582 = vld [vmem:[#allocation2 + $0x8] sm:$0xff]
        %v583 = vld [vmem:[#allocation2 + $0x10] sm:$0xff]
        %v584 = vld [vmem:[#allocation2 + $0x18] sm:$0xff]
        %v585 = vld [vmem:[#allocation2 + $0x20] sm:$0xff]
        %v586 = vld [vmem:[#allocation2 + $0x28] sm:$0xff]
        %v587 = vld [vmem:[#allocation2 + $0x30] sm:$0xff]
        %v588 = vld [vmem:[#allocation2 + $0x38] sm:$0xff]
        %v589 = vld [vmem:[#allocation2 + $0x40] sm:$0xff]
        %v590 = vld [vmem:[#allocation2 + $0x48] sm:$0xff]
        %v591 = vld [vmem:[#allocation2 + $0x50] sm:$0xff]
        %v592 = vld [vmem:[#allocation2 + $0x58] sm:$0xff]
        %v593 = vld [vmem:[#allocation2 + $0x60] sm:$0xff]
        %v594 = vld [vmem:[#allocation2 + $0x68] sm:$0xff]
        %v595 = vld [vmem:[#allocation2 + $0x70] sm:$0xff]
        %v596 = vld [vmem:[#allocation2 + $0x78] sm:$0xff]
        %v597 = vld [vmem:[#allocation2 + $0x80] sm:$0xff]
        %v598 = vld [vmem:[#allocation2 + $0x88] sm:$0xff]
        %v599 = vld [vmem:[#allocation2 + $0x90] sm:$0xff]
        %v600 = vld [vmem:[#allocation2 + $0x98] sm:$0xff]
        %v601 = vld [vmem:[#allocation2 + $0xa0] sm:$0xff]
        %v602 = vld [vmem:[#allocation2 + $0xa8] sm:$0xff]
        %v603 = vld [vmem:[#allocation2 + $0xb0] sm:$0xff]
        %v604 = vld [vmem:[#allocation2 + $0xb8] sm:$0xff]
        %v605 = vld [vmem:[#allocation2 + $0xc0] sm:$0xff]
        %v606 = vld [vmem:[#allocation2 + $0xc8] sm:$0xff]
        %v607 = vld [vmem:[#allocation2 + $0xd0] sm:$0xff]
        %v608 = vld [vmem:[#allocation2 + $0xd8] sm:$0xff]
        %v609 = vld [vmem:[#allocation2 + $0xe0] sm:$0xff]
        %v610 = vld [vmem:[#allocation2 + $0xe8] sm:$0xff]
        %v611 = vld [vmem:[#allocation2 + $0xf0] sm:$0xff]
        %v612 = vld [vmem:[#allocation2 + $0xf8] sm:$0xff]
        %v613 = vsel %vm453, 1, 0
        %v614 = vsel %vm454, 1, 0
        %v615 = vsel %vm455, 1, 0
        %v616 = vsel %vm456, 1, 0
        %v617 = vsel %vm457, 1, 0
        %v618 = vsel %vm458, 1, 0
        %v619 = vsel %vm459, 1, 0
        %v620 = vsel %vm460, 1, 0
        %v621 = vsel %vm461, 1, 0
        %v622 = vsel %vm462, 1, 0
        %v623 = vsel %vm463, 1, 0
        %v624 = vsel %vm464, 1, 0
        %v625 = vsel %vm465, 1, 0
        %v626 = vsel %vm466, 1, 0
        %v627 = vsel %vm467, 1, 0
        %v628 = vsel %vm468, 1, 0
        %v629 = vsel %vm469, 1, 0
        %v630 = vsel %vm470, 1, 0
        %v631 = vsel %vm471, 1, 0
        %v632 = vsel %vm472, 1, 0
        %v633 = vsel %vm473, 1, 0
        %v634 = vsel %vm474, 1, 0
        %v635 = vsel %vm475, 1, 0
        %v636 = vsel %vm476, 1, 0
        %v637 = vsel %vm477, 1, 0
        %v638 = vsel %vm478, 1, 0
        %v639 = vsel %vm479, 1, 0
        %v640 = vsel %vm480, 1, 0
        %v641 = vsel %vm481, 1, 0
        %v642 = vsel %vm482, 1, 0
        %v643 = vsel %vm483, 1, 0
        %v644 = vsel %vm484, 1, 0
        %v645 = vsel %vm485, 1, 0
        %v646 = vsel %vm486, 1, 0
        %v647 = vsel %vm487, 1, 0
        %v648 = vsel %vm488, 1, 0
        %v649 = vsel %vm489, 1, 0
        %v650 = vsel %vm490, 1, 0
        %v651 = vsel %vm491, 1, 0
        %v652 = vsel %vm492, 1, 0
        %v653 = vsel %vm493, 1, 0
        %v654 = vsel %vm494, 1, 0
        %v655 = vsel %vm495, 1, 0
        %v656 = vsel %vm496, 1, 0
        %v657 = vsel %vm497, 1, 0
        %v658 = vsel %vm498, 1, 0
        %v659 = vsel %vm499, 1, 0
        %v660 = vsel %vm500, 1, 0
        %v661 = vsel %vm501, 1, 0
        %v662 = vsel %vm502, 1, 0
        %v663 = vsel %vm503, 1, 0
        %v664 = vsel %vm504, 1, 0
        %v665 = vsel %vm505, 1, 0
        %v666 = vsel %vm506, 1, 0
        %v667 = vsel %vm507, 1, 0
        %v668 = vsel %vm508, 1, 0
        %v669 = vsel %vm509, 1, 0
        %v670 = vsel %vm510, 1, 0
        %v671 = vsel %vm511, 1, 0
        %v672 = vsel %vm512, 1, 0
        %v673 = vsel %vm513, 1, 0
        %v674 = vsel %vm514, 1, 0
        %v675 = vsel %vm515, 1, 0
        %v676 = vsel %vm516, 1, 0
        %v677 = vsel %vm517, 1, 0
        %v678 = vsel %vm518, 1, 0
        %v679 = vsel %vm519, 1, 0
        %v680 = vsel %vm520, 1, 0
        %v681 = vsel %vm521, 1, 0
        %v682 = vsel %vm522, 1, 0
        %v683 = vsel %vm523, 1, 0
        %v684 = vsel %vm524, 1, 0
        %v685 = vsel %vm525, 1, 0
        %v686 = vsel %vm526, 1, 0
        %v687 = vsel %vm527, 1, 0
        %v688 = vsel %vm528, 1, 0
        %v689 = vsel %vm529, 1, 0
        %v690 = vsel %vm530, 1, 0
        %v691 = vsel %vm531, 1, 0
        %v692 = vsel %vm532, 1, 0
        %v693 = vsel %vm533, 1, 0
        %v694 = vsel %vm534, 1, 0
        %v695 = vsel %vm535, 1, 0
        %v696 = vsel %vm536, 1, 0
        %v697 = vsel %vm537, 1, 0
        %v698 = vsel %vm538, 1, 0
        %v699 = vsel %vm539, 1, 0
        %v700 = vsel %vm540, 1, 0
        %v701 = vsel %vm541, 1, 0
        %v702 = vsel %vm542, 1, 0
        %v703 = vsel %vm543, 1, 0
        %v704 = vsel %vm544, 1, 0
        %v705 = vsel %vm545, 1, 0
        %v706 = vsel %vm546, 1, 0
        %v707 = vsel %vm547, 1, 0
        %v708 = vsel %vm548, 1, 0
        %v709 = vsel %vm549, 1, 0
        %v710 = vsel %vm550, 1, 0
        %v711 = vsel %vm551, 1, 0
        %v712 = vsel %vm552, 1, 0
        %v713 = vsel %vm553, 1, 0
        %v714 = vsel %vm554, 1, 0
        %v715 = vsel %vm555, 1, 0
        %v716 = vsel %vm556, 1, 0
        %v717 = vsel %vm557, 1, 0
        %v718 = vsel %vm558, 1, 0
        %v719 = vsel %vm559, 1, 0
        %v720 = vsel %vm560, 1, 0
        %v721 = vsel %vm561, 1, 0
        %v722 = vsel %vm562, 1, 0
        %v723 = vsel %vm563, 1, 0
        %v724 = vsel %vm564, 1, 0
        %v725 = vsel %vm565, 1, 0
        %v726 = vsel %vm566, 1, 0
        %v727 = vsel %vm567, 1, 0
        %v728 = vsel %vm568, 1, 0
        %v729 = vsel %vm569, 1, 0
        %v730 = vsel %vm570, 1, 0
        %v731 = vsel %vm571, 1, 0
        %v732 = vsel %vm572, 1, 0
        %v733 = vsel %vm573, 1, 0
        %v734 = vsel %vm574, 1, 0
        %v735 = vsel %vm575, 1, 0
        %v736 = vsel %vm576, 1, 0
        %v737 = vsel %vm577, 1, 0
        %v738 = vsel %vm578, 1, 0
        %v739 = vsel %vm579, 1, 0
        %v740 = vsel %vm580, 1, 0
        %v741 = vcvt.s32.f32 %v613
        %v742 = vcvt.s32.f32 %v614
        %v743 = vcvt.s32.f32 %v615
        %v744 = vcvt.s32.f32 %v616
        %v745 = vcvt.s32.f32 %v617
        %v746 = vcvt.s32.f32 %v618
        %v747 = vcvt.s32.f32 %v619
        %v748 = vcvt.s32.f32 %v620
        %v749 = vcvt.s32.f32 %v621
        %v750 = vcvt.s32.f32 %v622
        %v751 = vcvt.s32.f32 %v623
        %v752 = vcvt.s32.f32 %v624
        %v753 = vcvt.s32.f32 %v625
        %v754 = vcvt.s32.f32 %v626
        %v755 = vcvt.s32.f32 %v627
        %v756 = vcvt.s32.f32 %v628
        %v757 = vcvt.s32.f32 %v629
        %v758 = vcvt.s32.f32 %v630
        %v759 = vcvt.s32.f32 %v631
        %v760 = vcvt.s32.f32 %v632
        %v761 = vcvt.s32.f32 %v633
        %v762 = vcvt.s32.f32 %v634
        %v763 = vcvt.s32.f32 %v635
        %v764 = vcvt.s32.f32 %v636
        %v765 = vcvt.s32.f32 %v637
        %v766 = vcvt.s32.f32 %v638
        %v767 = vcvt.s32.f32 %v639
        %v768 = vcvt.s32.f32 %v640
        %v769 = vcvt.s32.f32 %v641
        %v770 = vcvt.s32.f32 %v642
        %v771 = vcvt.s32.f32 %v643
        %v772 = vcvt.s32.f32 %v644
        %v773 = vcvt.s32.f32 %v645
        %v774 = vcvt.s32.f32 %v646
        %v775 = vcvt.s32.f32 %v647
        %v776 = vcvt.s32.f32 %v648
        %v777 = vcvt.s32.f32 %v649
        %v778 = vcvt.s32.f32 %v650
        %v779 = vcvt.s32.f32 %v651
        %v780 = vcvt.s32.f32 %v652
        %v781 = vcvt.s32.f32 %v653
        %v782 = vcvt.s32.f32 %v654
        %v783 = vcvt.s32.f32 %v655
        %v784 = vcvt.s32.f32 %v656
        %v785 = vcvt.s32.f32 %v657
        %v786 = vcvt.s32.f32 %v658
        %v787 = vcvt.s32.f32 %v659
        %v788 = vcvt.s32.f32 %v660
        %v789 = vcvt.s32.f32 %v661
        %v790 = vcvt.s32.f32 %v662
        %v791 = vcvt.s32.f32 %v663
        %v792 = vcvt.s32.f32 %v664
        %v793 = vcvt.s32.f32 %v665
        %v794 = vcvt.s32.f32 %v666
        %v795 = vcvt.s32.f32 %v667
        %v796 = vcvt.s32.f32 %v668
        %v797 = vcvt.s32.f32 %v669
        %v798 = vcvt.s32.f32 %v670
        %v799 = vcvt.s32.f32 %v671
        %v800 = vcvt.s32.f32 %v672
        %v801 = vcvt.s32.f32 %v673
        %v802 = vcvt.s32.f32 %v674
        %v803 = vcvt.s32.f32 %v675
        %v804 = vcvt.s32.f32 %v676
        %v805 = vcvt.s32.f32 %v677
        %v806 = vcvt.s32.f32 %v678
        %v807 = vcvt.s32.f32 %v679
        %v808 = vcvt.s32.f32 %v680
        %v809 = vcvt.s32.f32 %v681
        %v810 = vcvt.s32.f32 %v682
        %v811 = vcvt.s32.f32 %v683
        %v812 = vcvt.s32.f32 %v684
        %v813 = vcvt.s32.f32 %v685
        %v814 = vcvt.s32.f32 %v686
        %v815 = vcvt.s32.f32 %v687
        %v816 = vcvt.s32.f32 %v688
        %v817 = vcvt.s32.f32 %v689
        %v818 = vcvt.s32.f32 %v690
        %v819 = vcvt.s32.f32 %v691
        %v820 = vcvt.s32.f32 %v692
        %v821 = vcvt.s32.f32 %v693
        %v822 = vcvt.s32.f32 %v694
        %v823 = vcvt.s32.f32 %v695
        %v824 = vcvt.s32.f32 %v696
        %v825 = vcvt.s32.f32 %v697
        %v826 = vcvt.s32.f32 %v698
        %v827 = vcvt.s32.f32 %v699
        %v828 = vcvt.s32.f32 %v700
        %v829 = vcvt.s32.f32 %v701
        %v830 = vcvt.s32.f32 %v702
        %v831 = vcvt.s32.f32 %v703
        %v832 = vcvt.s32.f32 %v704
        %v833 = vcvt.s32.f32 %v705
        %v834 = vcvt.s32.f32 %v706
        %v835 = vcvt.s32.f32 %v707
        %v836 = vcvt.s32.f32 %v708
        %v837 = vcvt.s32.f32 %v709
        %v838 = vcvt.s32.f32 %v710
        %v839 = vcvt.s32.f32 %v711
        %v840 = vcvt.s32.f32 %v712
        %v841 = vcvt.s32.f32 %v713
        %v842 = vcvt.s32.f32 %v714
        %v843 = vcvt.s32.f32 %v715
        %v844 = vcvt.s32.f32 %v716
        %v845 = vcvt.s32.f32 %v717
        %v846 = vcvt.s32.f32 %v718
        %v847 = vcvt.s32.f32 %v719
        %v848 = vcvt.s32.f32 %v720
        %v849 = vcvt.s32.f32 %v721
        %v850 = vcvt.s32.f32 %v722
        %v851 = vcvt.s32.f32 %v723
        %v852 = vcvt.s32.f32 %v724
        %v853 = vcvt.s32.f32 %v725
        %v854 = vcvt.s32.f32 %v726
        %v855 = vcvt.s32.f32 %v727
        %v856 = vcvt.s32.f32 %v728
        %v857 = vcvt.s32.f32 %v729
        %v858 = vcvt.s32.f32 %v730
        %v859 = vcvt.s32.f32 %v731
        %v860 = vcvt.s32.f32 %v732
        %v861 = vcvt.s32.f32 %v733
        %v862 = vcvt.s32.f32 %v734
        %v863 = vcvt.s32.f32 %v735
        %v864 = vcvt.s32.f32 %v736
        %v865 = vcvt.s32.f32 %v737
        %v866 = vcvt.s32.f32 %v738
        %v867 = vcvt.s32.f32 %v739
        %v868 = vcvt.s32.f32 %v740
        %v869 = vpack.c.bf16 %v745, %v741
        %v870 = vpack.c.bf16 %v746, %v742
        %v871 = vpack.c.bf16 %v747, %v743
        %v872 = vpack.c.bf16 %v748, %v744
        %v873 = vpack.c.bf16 %v753, %v749
        %v874 = vpack.c.bf16 %v754, %v750
        %v875 = vpack.c.bf16 %v755, %v751
        %v876 = vpack.c.bf16 %v756, %v752
        %v877 = vpack.c.bf16 %v761, %v757
        %v878 = vpack.c.bf16 %v762, %v758
        %v879 = vpack.c.bf16 %v763, %v759
        %v880 = vpack.c.bf16 %v764, %v760
        %v881 = vpack.c.bf16 %v769, %v765
        %v882 = vpack.c.bf16 %v770, %v766
        %v883 = vpack.c.bf16 %v771, %v767
        %v884 = vpack.c.bf16 %v772, %v768
        %v885 = vpack.c.bf16 %v777, %v773
        %v886 = vpack.c.bf16 %v778, %v774
        %v887 = vpack.c.bf16 %v779, %v775
        %v888 = vpack.c.bf16 %v780, %v776
        %v889 = vpack.c.bf16 %v785, %v781
        %v890 = vpack.c.bf16 %v786, %v782
        %v891 = vpack.c.bf16 %v787, %v783
        %v892 = vpack.c.bf16 %v788, %v784
        %v893 = vpack.c.bf16 %v793, %v789
        %v894 = vpack.c.bf16 %v794, %v790
        %v895 = vpack.c.bf16 %v795, %v791
        %v896 = vpack.c.bf16 %v796, %v792
        %v897 = vpack.c.bf16 %v801, %v797
        %v898 = vpack.c.bf16 %v802, %v798
        %v899 = vpack.c.bf16 %v803, %v799
        %v900 = vpack.c.bf16 %v804, %v800
        %v901 = vpack.c.bf16 %v809, %v805
        %v902 = vpack.c.bf16 %v810, %v806
        %v903 = vpack.c.bf16 %v811, %v807
        %v904 = vpack.c.bf16 %v812, %v808
        %v905 = vpack.c.bf16 %v817, %v813
        %v906 = vpack.c.bf16 %v818, %v814
        %v907 = vpack.c.bf16 %v819, %v815
        %v908 = vpack.c.bf16 %v820, %v816
        %v909 = vpack.c.bf16 %v825, %v821
        %v910 = vpack.c.bf16 %v826, %v822
        %v911 = vpack.c.bf16 %v827, %v823
        %v912 = vpack.c.bf16 %v828, %v824
        %v913 = vpack.c.bf16 %v833, %v829
        %v914 = vpack.c.bf16 %v834, %v830
        %v915 = vpack.c.bf16 %v835, %v831
        %v916 = vpack.c.bf16 %v836, %v832
        %v917 = vpack.c.bf16 %v841, %v837
        %v918 = vpack.c.bf16 %v842, %v838
        %v919 = vpack.c.bf16 %v843, %v839
        %v920 = vpack.c.bf16 %v844, %v840
        %v921 = vpack.c.bf16 %v849, %v845
        %v922 = vpack.c.bf16 %v850, %v846
        %v923 = vpack.c.bf16 %v851, %v847
        %v924 = vpack.c.bf16 %v852, %v848
        %v925 = vpack.c.bf16 %v857, %v853
        %v926 = vpack.c.bf16 %v858, %v854
        %v927 = vpack.c.bf16 %v859, %v855
        %v928 = vpack.c.bf16 %v860, %v856
        %v929 = vpack.c.bf16 %v865, %v861
        %v930 = vpack.c.bf16 %v866, %v862
        %v931 = vpack.c.bf16 %v867, %v863
        %v932 = vpack.c.bf16 %v868, %v864
        %933 = vmatpush.bf16.msra.mxu0 1065369472
        %934 = vmatpush.bf16.msra.mxu0 1065369472
        %935 = vmatpush.bf16.msra.mxu0 1065369472
        %936 = vmatpush.bf16.msra.mxu0 1065369472
        %937 = vmatpush.bf16.msra.mxu0 1065369472
        %938 = vmatpush.bf16.msra.mxu0 1065369472
        %939 = vmatpush.bf16.msra.mxu0 1065369472
        %940 = vmatpush.bf16.msra.mxu0 1065369472
        %941 = vmatmul.bf16.gmra.mxu0 %v869
        %v942 = vpop.f32.mrf.mxu0
        %v943 = vadd.f32 0.0, %v942
        %v944 = vpop.f32.mrf.mxu0
        %v945 = vadd.f32 0.0, %v944
        %946 = vmatmul.bf16.gmra.mxu0 %v873
        %v947 = vpop.f32.mrf.mxu0
        %v948 = vadd.f32 0.0, %v947
        %v949 = vpop.f32.mrf.mxu0
        %v950 = vadd.f32 0.0, %v949
        %951 = vmatmul.bf16.gmra.mxu0 %v877
        %v952 = vpop.f32.mrf.mxu0
        %v953 = vadd.f32 0.0, %v952
        %v954 = vpop.f32.mrf.mxu0
        %v955 = vadd.f32 0.0, %v954
        %956 = vmatmul.bf16.gmra.mxu0 %v881
        %v957 = vpop.f32.mrf.mxu0
        %v958 = vadd.f32 0.0, %v957
        %v959 = vpop.f32.mrf.mxu0
        %v960 = vadd.f32 0.0, %v959
        %961 = vmatmul.bf16.gmra.mxu0 %v885
        %v962 = vpop.f32.mrf.mxu0
        %v963 = vadd.f32 0.0, %v962
        %v964 = vpop.f32.mrf.mxu0
        %v965 = vadd.f32 0.0, %v964
        %966 = vmatmul.bf16.gmra.mxu0 %v889
        %v967 = vpop.f32.mrf.mxu0
        %v968 = vadd.f32 0.0, %v967
        %v969 = vpop.f32.mrf.mxu0
        %v970 = vadd.f32 0.0, %v969
        %971 = vmatmul.bf16.gmra.mxu0 %v893
        %v972 = vpop.f32.mrf.mxu0
        %v973 = vadd.f32 0.0, %v972
        %v974 = vpop.f32.mrf.mxu0
        %v975 = vadd.f32 0.0, %v974
        %976 = vmatmul.bf16.gmra.mxu0 %v897
        %v977 = vpop.f32.mrf.mxu0
        %v978 = vadd.f32 0.0, %v977
        %v979 = vpop.f32.mrf.mxu0
        %v980 = vadd.f32 0.0, %v979
        %981 = vmatmul.bf16.gmra.mxu0 %v901
        %v982 = vpop.f32.mrf.mxu0
        %v983 = vadd.f32 0.0, %v982
        %v984 = vpop.f32.mrf.mxu0
        %v985 = vadd.f32 0.0, %v984
        %986 = vmatmul.bf16.gmra.mxu0 %v905
        %v987 = vpop.f32.mrf.mxu0
        %v988 = vadd.f32 0.0, %v987
        %v989 = vpop.f32.mrf.mxu0
        %v990 = vadd.f32 0.0, %v989
        %991 = vmatmul.bf16.gmra.mxu0 %v909
        %v992 = vpop.f32.mrf.mxu0
        %v993 = vadd.f32 0.0, %v992
        %v994 = vpop.f32.mrf.mxu0
        %v995 = vadd.f32 0.0, %v994
        %996 = vmatmul.bf16.gmra.mxu0 %v913
        %v997 = vpop.f32.mrf.mxu0
        %v998 = vadd.f32 0.0, %v997
        %v999 = vpop.f32.mrf.mxu0
        %v1000 = vadd.f32 0.0, %v999
        %1001 = vmatmul.bf16.gmra.mxu0 %v917
        %v1002 = vpop.f32.mrf.mxu0
        %v1003 = vadd.f32 0.0, %v1002
        %v1004 = vpop.f32.mrf.mxu0
        %v1005 = vadd.f32 0.0, %v1004
        %1006 = vmatmul.bf16.gmra.mxu0 %v921
        %v1007 = vpop.f32.mrf.mxu0
        %v1008 = vadd.f32 0.0, %v1007
        %v1009 = vpop.f32.mrf.mxu0
        %v1010 = vadd.f32 0.0, %v1009
        %1011 = vmatmul.bf16.gmra.mxu0 %v925
        %v1012 = vpop.f32.mrf.mxu0
        %v1013 = vadd.f32 0.0, %v1012
        %v1014 = vpop.f32.mrf.mxu0
        %v1015 = vadd.f32 0.0, %v1014
        %1016 = vmatmul.bf16.gmra.mxu0 %v929
        %v1017 = vpop.f32.mrf.mxu0
        %v1018 = vadd.f32 0.0, %v1017
        %v1019 = vpop.f32.mrf.mxu0
        %v1020 = vadd.f32 0.0, %v1019
        %1021 = vdwg.mxu0
        %1022 = vmatpush.bf16.msra.mxu0 1065369472
        %1023 = vmatpush.bf16.msra.mxu0 1065369472
        %1024 = vmatpush.bf16.msra.mxu0 1065369472
        %1025 = vmatpush.bf16.msra.mxu0 1065369472
        %1026 = vmatpush.bf16.msra.mxu0 1065369472
        %1027 = vmatpush.bf16.msra.mxu0 1065369472
        %1028 = vmatpush.bf16.msra.mxu0 1065369472
        %1029 = vmatpush.bf16.msra.mxu0 1065369472
        %1030 = vmatmul.bf16.gmra.mxu0 %v870
        %v1031 = vpop.f32.mrf.mxu0
        %v1032 = vadd.f32 %v943, %v1031
        %v1033 = vpop.f32.mrf.mxu0
        %v1034 = vadd.f32 %v945, %v1033
        %1035 = vmatmul.bf16.gmra.mxu0 %v874
        %v1036 = vpop.f32.mrf.mxu0
        %v1037 = vadd.f32 %v948, %v1036
        %v1038 = vpop.f32.mrf.mxu0
        %v1039 = vadd.f32 %v950, %v1038
        %1040 = vmatmul.bf16.gmra.mxu0 %v878
        %v1041 = vpop.f32.mrf.mxu0
        %v1042 = vadd.f32 %v953, %v1041
        %v1043 = vpop.f32.mrf.mxu0
        %v1044 = vadd.f32 %v955, %v1043
        %1045 = vmatmul.bf16.gmra.mxu0 %v882
        %v1046 = vpop.f32.mrf.mxu0
        %v1047 = vadd.f32 %v958, %v1046
        %v1048 = vpop.f32.mrf.mxu0
        %v1049 = vadd.f32 %v960, %v1048
        %1050 = vmatmul.bf16.gmra.mxu0 %v886
        %v1051 = vpop.f32.mrf.mxu0
        %v1052 = vadd.f32 %v963, %v1051
        %v1053 = vpop.f32.mrf.mxu0
        %v1054 = vadd.f32 %v965, %v1053
        %1055 = vmatmul.bf16.gmra.mxu0 %v890
        %v1056 = vpop.f32.mrf.mxu0
        %v1057 = vadd.f32 %v968, %v1056
        %v1058 = vpop.f32.mrf.mxu0
        %v1059 = vadd.f32 %v970, %v1058
        %1060 = vmatmul.bf16.gmra.mxu0 %v894
        %v1061 = vpop.f32.mrf.mxu0
        %v1062 = vadd.f32 %v973, %v1061
        %v1063 = vpop.f32.mrf.mxu0
        %v1064 = vadd.f32 %v975, %v1063
        %1065 = vmatmul.bf16.gmra.mxu0 %v898
        %v1066 = vpop.f32.mrf.mxu0
        %v1067 = vadd.f32 %v978, %v1066
        %v1068 = vpop.f32.mrf.mxu0
        %v1069 = vadd.f32 %v980, %v1068
        %1070 = vmatmul.bf16.gmra.mxu0 %v902
        %v1071 = vpop.f32.mrf.mxu0
        %v1072 = vadd.f32 %v983, %v1071
        %v1073 = vpop.f32.mrf.mxu0
        %v1074 = vadd.f32 %v985, %v1073
        %1075 = vmatmul.bf16.gmra.mxu0 %v906
        %v1076 = vpop.f32.mrf.mxu0
        %v1077 = vadd.f32 %v988, %v1076
        %v1078 = vpop.f32.mrf.mxu0
        %v1079 = vadd.f32 %v990, %v1078
        %1080 = vmatmul.bf16.gmra.mxu0 %v910
        %v1081 = vpop.f32.mrf.mxu0
        %v1082 = vadd.f32 %v993, %v1081
        %v1083 = vpop.f32.mrf.mxu0
        %v1084 = vadd.f32 %v995, %v1083
        %1085 = vmatmul.bf16.gmra.mxu0 %v914
        %v1086 = vpop.f32.mrf.mxu0
        %v1087 = vadd.f32 %v998, %v1086
        %v1088 = vpop.f32.mrf.mxu0
        %v1089 = vadd.f32 %v1000, %v1088
        %1090 = vmatmul.bf16.gmra.mxu0 %v918
        %v1091 = vpop.f32.mrf.mxu0
        %v1092 = vadd.f32 %v1003, %v1091
        %v1093 = vpop.f32.mrf.mxu0
        %v1094 = vadd.f32 %v1005, %v1093
        %1095 = vmatmul.bf16.gmra.mxu0 %v922
        %v1096 = vpop.f32.mrf.mxu0
        %v1097 = vadd.f32 %v1008, %v1096
        %v1098 = vpop.f32.mrf.mxu0
        %v1099 = vadd.f32 %v1010, %v1098
        %1100 = vmatmul.bf16.gmra.mxu0 %v926
        %v1101 = vpop.f32.mrf.mxu0
        %v1102 = vadd.f32 %v1013, %v1101
        %v1103 = vpop.f32.mrf.mxu0
        %v1104 = vadd.f32 %v1015, %v1103
        %1105 = vmatmul.bf16.gmra.mxu0 %v930
        %v1106 = vpop.f32.mrf.mxu0
        %v1107 = vadd.f32 %v1018, %v1106
        %v1108 = vpop.f32.mrf.mxu0
        %v1109 = vadd.f32 %v1020, %v1108
        %1110 = vdwg.mxu0
        %1111 = vmatpush.bf16.msra.mxu0 1065369472
        %1112 = vmatpush.bf16.msra.mxu0 1065369472
        %1113 = vmatpush.bf16.msra.mxu0 1065369472
        %1114 = vmatpush.bf16.msra.mxu0 1065369472
        %1115 = vmatpush.bf16.msra.mxu0 1065369472
        %1116 = vmatpush.bf16.msra.mxu0 1065369472
        %1117 = vmatpush.bf16.msra.mxu0 1065369472
        %1118 = vmatpush.bf16.msra.mxu0 1065369472
        %1119 = vmatmul.bf16.gmra.mxu0 %v871
        %v1120 = vpop.f32.mrf.mxu0
        %v1121 = vadd.f32 %v1032, %v1120
        %v1122 = vpop.f32.mrf.mxu0
        %v1123 = vadd.f32 %v1034, %v1122
        %1124 = vmatmul.bf16.gmra.mxu0 %v875
        %v1125 = vpop.f32.mrf.mxu0
        %v1126 = vadd.f32 %v1037, %v1125
        %v1127 = vpop.f32.mrf.mxu0
        %v1128 = vadd.f32 %v1039, %v1127
        %1129 = vmatmul.bf16.gmra.mxu0 %v879
        %v1130 = vpop.f32.mrf.mxu0
        %v1131 = vadd.f32 %v1042, %v1130
        %v1132 = vpop.f32.mrf.mxu0
        %v1133 = vadd.f32 %v1044, %v1132
        %1134 = vmatmul.bf16.gmra.mxu0 %v883
        %v1135 = vpop.f32.mrf.mxu0
        %v1136 = vadd.f32 %v1047, %v1135
        %v1137 = vpop.f32.mrf.mxu0
        %v1138 = vadd.f32 %v1049, %v1137
        %1139 = vmatmul.bf16.gmra.mxu0 %v887
        %v1140 = vpop.f32.mrf.mxu0
        %v1141 = vadd.f32 %v1052, %v1140
        %v1142 = vpop.f32.mrf.mxu0
        %v1143 = vadd.f32 %v1054, %v1142
        %1144 = vmatmul.bf16.gmra.mxu0 %v891
        %v1145 = vpop.f32.mrf.mxu0
        %v1146 = vadd.f32 %v1057, %v1145
        %v1147 = vpop.f32.mrf.mxu0
        %v1148 = vadd.f32 %v1059, %v1147
        %1149 = vmatmul.bf16.gmra.mxu0 %v895
        %v1150 = vpop.f32.mrf.mxu0
        %v1151 = vadd.f32 %v1062, %v1150
        %v1152 = vpop.f32.mrf.mxu0
        %v1153 = vadd.f32 %v1064, %v1152
        %1154 = vmatmul.bf16.gmra.mxu0 %v899
        %v1155 = vpop.f32.mrf.mxu0
        %v1156 = vadd.f32 %v1067, %v1155
        %v1157 = vpop.f32.mrf.mxu0
        %v1158 = vadd.f32 %v1069, %v1157
        %1159 = vmatmul.bf16.gmra.mxu0 %v903
        %v1160 = vpop.f32.mrf.mxu0
        %v1161 = vadd.f32 %v1072, %v1160
        %v1162 = vpop.f32.mrf.mxu0
        %v1163 = vadd.f32 %v1074, %v1162
        %1164 = vmatmul.bf16.gmra.mxu0 %v907
        %v1165 = vpop.f32.mrf.mxu0
        %v1166 = vadd.f32 %v1077, %v1165
        %v1167 = vpop.f32.mrf.mxu0
        %v1168 = vadd.f32 %v1079, %v1167
        %1169 = vmatmul.bf16.gmra.mxu0 %v911
        %v1170 = vpop.f32.mrf.mxu0
        %v1171 = vadd.f32 %v1082, %v1170
        %v1172 = vpop.f32.mrf.mxu0
        %v1173 = vadd.f32 %v1084, %v1172
        %1174 = vmatmul.bf16.gmra.mxu0 %v915
        %v1175 = vpop.f32.mrf.mxu0
        %v1176 = vadd.f32 %v1087, %v1175
        %v1177 = vpop.f32.mrf.mxu0
        %v1178 = vadd.f32 %v1089, %v1177
        %1179 = vmatmul.bf16.gmra.mxu0 %v919
        %v1180 = vpop.f32.mrf.mxu0
        %v1181 = vadd.f32 %v1092, %v1180
        %v1182 = vpop.f32.mrf.mxu0
        %v1183 = vadd.f32 %v1094, %v1182
        %1184 = vmatmul.bf16.gmra.mxu0 %v923
        %v1185 = vpop.f32.mrf.mxu0
        %v1186 = vadd.f32 %v1097, %v1185
        %v1187 = vpop.f32.mrf.mxu0
        %v1188 = vadd.f32 %v1099, %v1187
        %1189 = vmatmul.bf16.gmra.mxu0 %v927
        %v1190 = vpop.f32.mrf.mxu0
        %v1191 = vadd.f32 %v1102, %v1190
        %v1192 = vpop.f32.mrf.mxu0
        %v1193 = vadd.f32 %v1104, %v1192
        %1194 = vmatmul.bf16.gmra.mxu0 %v931
        %v1195 = vpop.f32.mrf.mxu0
        %v1196 = vadd.f32 %v1107, %v1195
        %v1197 = vpop.f32.mrf.mxu0
        %v1198 = vadd.f32 %v1109, %v1197
        %1199 = vdwg.mxu0
        %1200 = vmatpush.bf16.msra.mxu0 1065369472
        %1201 = vmatpush.bf16.msra.mxu0 1065369472
        %1202 = vmatpush.bf16.msra.mxu0 1065369472
        %1203 = vmatpush.bf16.msra.mxu0 1065369472
        %1204 = vmatpush.bf16.msra.mxu0 1065369472
        %1205 = vmatpush.bf16.msra.mxu0 1065369472
        %1206 = vmatpush.bf16.msra.mxu0 1065369472
        %1207 = vmatpush.bf16.msra.mxu0 1065369472
        %1208 = vmatmul.bf16.gmra.mxu0 %v872
        %v1209 = vpop.f32.mrf.mxu0
        %v1210 = vadd.f32 %v1121, %v1209
        %v1211 = vpop.f32.mrf.mxu0
        %v1212 = vadd.f32 %v1123, %v1211
        %1213 = vmatmul.bf16.gmra.mxu0 %v876
        %v1214 = vpop.f32.mrf.mxu0
        %v1215 = vadd.f32 %v1126, %v1214
        %v1216 = vpop.f32.mrf.mxu0
        %v1217 = vadd.f32 %v1128, %v1216
        %1218 = vmatmul.bf16.gmra.mxu0 %v880
        %v1219 = vpop.f32.mrf.mxu0
        %v1220 = vadd.f32 %v1131, %v1219
        %v1221 = vpop.f32.mrf.mxu0
        %v1222 = vadd.f32 %v1133, %v1221
        %1223 = vmatmul.bf16.gmra.mxu0 %v884
        %v1224 = vpop.f32.mrf.mxu0
        %v1225 = vadd.f32 %v1136, %v1224
        %v1226 = vpop.f32.mrf.mxu0
        %v1227 = vadd.f32 %v1138, %v1226
        %1228 = vmatmul.bf16.gmra.mxu0 %v888
        %v1229 = vpop.f32.mrf.mxu0
        %v1230 = vadd.f32 %v1141, %v1229
        %v1231 = vpop.f32.mrf.mxu0
        %v1232 = vadd.f32 %v1143, %v1231
        %1233 = vmatmul.bf16.gmra.mxu0 %v892
        %v1234 = vpop.f32.mrf.mxu0
        %v1235 = vadd.f32 %v1146, %v1234
        %v1236 = vpop.f32.mrf.mxu0
        %v1237 = vadd.f32 %v1148, %v1236
        %1238 = vmatmul.bf16.gmra.mxu0 %v896
        %v1239 = vpop.f32.mrf.mxu0
        %v1240 = vadd.f32 %v1151, %v1239
        %v1241 = vpop.f32.mrf.mxu0
        %v1242 = vadd.f32 %v1153, %v1241
        %1243 = vmatmul.bf16.gmra.mxu0 %v900
        %v1244 = vpop.f32.mrf.mxu0
        %v1245 = vadd.f32 %v1156, %v1244
        %v1246 = vpop.f32.mrf.mxu0
        %v1247 = vadd.f32 %v1158, %v1246
        %1248 = vmatmul.bf16.gmra.mxu0 %v904
        %v1249 = vpop.f32.mrf.mxu0
        %v1250 = vadd.f32 %v1161, %v1249
        %v1251 = vpop.f32.mrf.mxu0
        %v1252 = vadd.f32 %v1163, %v1251
        %1253 = vmatmul.bf16.gmra.mxu0 %v908
        %v1254 = vpop.f32.mrf.mxu0
        %v1255 = vadd.f32 %v1166, %v1254
        %v1256 = vpop.f32.mrf.mxu0
        %v1257 = vadd.f32 %v1168, %v1256
        %1258 = vmatmul.bf16.gmra.mxu0 %v912
        %v1259 = vpop.f32.mrf.mxu0
        %v1260 = vadd.f32 %v1171, %v1259
        %v1261 = vpop.f32.mrf.mxu0
        %v1262 = vadd.f32 %v1173, %v1261
        %1263 = vmatmul.bf16.gmra.mxu0 %v916
        %v1264 = vpop.f32.mrf.mxu0
        %v1265 = vadd.f32 %v1176, %v1264
        %v1266 = vpop.f32.mrf.mxu0
        %v1267 = vadd.f32 %v1178, %v1266
        %1268 = vmatmul.bf16.gmra.mxu0 %v920
        %v1269 = vpop.f32.mrf.mxu0
        %v1270 = vadd.f32 %v1181, %v1269
        %v1271 = vpop.f32.mrf.mxu0
        %v1272 = vadd.f32 %v1183, %v1271
        %1273 = vmatmul.bf16.gmra.mxu0 %v924
        %v1274 = vpop.f32.mrf.mxu0
        %v1275 = vadd.f32 %v1186, %v1274
        %v1276 = vpop.f32.mrf.mxu0
        %v1277 = vadd.f32 %v1188, %v1276
        %1278 = vmatmul.bf16.gmra.mxu0 %v928
        %v1279 = vpop.f32.mrf.mxu0
        %v1280 = vadd.f32 %v1191, %v1279
        %v1281 = vpop.f32.mrf.mxu0
        %v1282 = vadd.f32 %v1193, %v1281
        %1283 = vmatmul.bf16.gmra.mxu0 %v932
        %v1284 = vpop.f32.mrf.mxu0
        %v1285 = vadd.f32 %v1196, %v1284
        %v1286 = vpop.f32.mrf.mxu0
        %v1287 = vadd.f32 %v1198, %v1286
        %1288 = vdwg.mxu0
        %v1289 = vadd.f32 %v581, %v1210
        %v1290 = vadd.f32 %v582, %v1212
        %v1291 = vadd.f32 %v583, %v1215
        %v1292 = vadd.f32 %v584, %v1217
        %v1293 = vadd.f32 %v585, %v1220
        %v1294 = vadd.f32 %v586, %v1222
        %v1295 = vadd.f32 %v587, %v1225
        %v1296 = vadd.f32 %v588, %v1227
        %v1297 = vadd.f32 %v589, %v1230
        %v1298 = vadd.f32 %v590, %v1232
        %v1299 = vadd.f32 %v591, %v1235
        %v1300 = vadd.f32 %v592, %v1237
        %v1301 = vadd.f32 %v593, %v1240
        %v1302 = vadd.f32 %v594, %v1242
        %v1303 = vadd.f32 %v595, %v1245
        %v1304 = vadd.f32 %v596, %v1247
        %v1305 = vadd.f32 %v597, %v1250
        %v1306 = vadd.f32 %v598, %v1252
        %v1307 = vadd.f32 %v599, %v1255
        %v1308 = vadd.f32 %v600, %v1257
        %v1309 = vadd.f32 %v601, %v1260
        %v1310 = vadd.f32 %v602, %v1262
        %v1311 = vadd.f32 %v603, %v1265
        %v1312 = vadd.f32 %v604, %v1267
        %v1313 = vadd.f32 %v605, %v1270
        %v1314 = vadd.f32 %v606, %v1272
        %v1315 = vadd.f32 %v607, %v1275
        %v1316 = vadd.f32 %v608, %v1277
        %v1317 = vadd.f32 %v609, %v1280
        %v1318 = vadd.f32 %v610, %v1282
        %v1319 = vadd.f32 %v611, %v1285
        %v1320 = vadd.f32 %v612, %v1287
        %vm1321 = vcmask 7168
        %1322 = vst.msk [vmem:[#allocation2] sm:$0xff] %vm1321, %v1289
        %1323 = vst.msk [vmem:[#allocation2 + $0x8] sm:$0xff] %vm1321, %v1290
        %1324 = vst.msk [vmem:[#allocation2 + $0x10] sm:$0xff] %vm1321, %v1291
        %1325 = vst.msk [vmem:[#allocation2 + $0x18] sm:$0xff] %vm1321, %v1292
        %1326 = vst.msk [vmem:[#allocation2 + $0x20] sm:$0xff] %vm1321, %v1293
        %1327 = vst.msk [vmem:[#allocation2 + $0x28] sm:$0xff] %vm1321, %v1294
        %1328 = vst.msk [vmem:[#allocation2 + $0x30] sm:$0xff] %vm1321, %v1295
        %1329 = vst.msk [vmem:[#allocation2 + $0x38] sm:$0xff] %vm1321, %v1296
        %1330 = vst.msk [vmem:[#allocation2 + $0x40] sm:$0xff] %vm1321, %v1297
        %1331 = vst.msk [vmem:[#allocation2 + $0x48] sm:$0xff] %vm1321, %v1298
        %1332 = vst.msk [vmem:[#allocation2 + $0x50] sm:$0xff] %vm1321, %v1299
        %1333 = vst.msk [vmem:[#allocation2 + $0x58] sm:$0xff] %vm1321, %v1300
        %1334 = vst.msk [vmem:[#allocation2 + $0x60] sm:$0xff] %vm1321, %v1301
        %1335 = vst.msk [vmem:[#allocation2 + $0x68] sm:$0xff] %vm1321, %v1302
        %1336 = vst.msk [vmem:[#allocation2 + $0x70] sm:$0xff] %vm1321, %v1303
        %1337 = vst.msk [vmem:[#allocation2 + $0x78] sm:$0xff] %vm1321, %v1304
        %1338 = vst.msk [vmem:[#allocation2 + $0x80] sm:$0xff] %vm1321, %v1305
        %1339 = vst.msk [vmem:[#allocation2 + $0x88] sm:$0xff] %vm1321, %v1306
        %1340 = vst.msk [vmem:[#allocation2 + $0x90] sm:$0xff] %vm1321, %v1307
        %1341 = vst.msk [vmem:[#allocation2 + $0x98] sm:$0xff] %vm1321, %v1308
        %1342 = vst.msk [vmem:[#allocation2 + $0xa0] sm:$0xff] %vm1321, %v1309
        %1343 = vst.msk [vmem:[#allocation2 + $0xa8] sm:$0xff] %vm1321, %v1310
        %1344 = vst.msk [vmem:[#allocation2 + $0xb0] sm:$0xff] %vm1321, %v1311
        %1345 = vst.msk [vmem:[#allocation2 + $0xb8] sm:$0xff] %vm1321, %v1312
        %1346 = vst.msk [vmem:[#allocation2 + $0xc0] sm:$0xff] %vm1321, %v1313
        %1347 = vst.msk [vmem:[#allocation2 + $0xc8] sm:$0xff] %vm1321, %v1314
        %1348 = vst.msk [vmem:[#allocation2 + $0xd0] sm:$0xff] %vm1321, %v1315
        %1349 = vst.msk [vmem:[#allocation2 + $0xd8] sm:$0xff] %vm1321, %v1316
        %1350 = vst.msk [vmem:[#allocation2 + $0xe0] sm:$0xff] %vm1321, %v1317
        %1351 = vst.msk [vmem:[#allocation2 + $0xe8] sm:$0xff] %vm1321, %v1318
        %1352 = vst.msk [vmem:[#allocation2 + $0xf0] sm:$0xff] %vm1321, %v1319
        %1353 = vst.msk [vmem:[#allocation2 + $0xf8] sm:$0xff] %vm1321, %v1320
        %p1354 = scmp.eq.s32.totalorder %s26, 2
        // Predicated region
        $region33: #{tpu_custom_call.1} parent=27 // pred_check
          %p1355 = pneg %p1354
        $region34: #{tpu_custom_call.1} parent=27 // pred_check_branch
          %1357 = sbr.rel (%p1355) target = $region36
        $region35: #{tpu_custom_call.1} parent=27 // pred_region
          %v1358 = vld [vmem:[#allocation2] sm:$0xff]
          %v1359 = vld [vmem:[#allocation2 + $0x8] sm:$0xff]
          %v1360 = vld [vmem:[#allocation2 + $0x10] sm:$0xff]
          %v1361 = vld [vmem:[#allocation2 + $0x18] sm:$0xff]
          %v1362 = vld [vmem:[#allocation2 + $0x20] sm:$0xff]
          %v1363 = vld [vmem:[#allocation2 + $0x28] sm:$0xff]
          %v1364 = vld [vmem:[#allocation2 + $0x30] sm:$0xff]
          %v1365 = vld [vmem:[#allocation2 + $0x38] sm:$0xff]
          %v1366 = vld [vmem:[#allocation2 + $0x40] sm:$0xff]
          %v1367 = vld [vmem:[#allocation2 + $0x48] sm:$0xff]
          %v1368 = vld [vmem:[#allocation2 + $0x50] sm:$0xff]
          %v1369 = vld [vmem:[#allocation2 + $0x58] sm:$0xff]
          %v1370 = vld [vmem:[#allocation2 + $0x60] sm:$0xff]
          %v1371 = vld [vmem:[#allocation2 + $0x68] sm:$0xff]
          %v1372 = vld [vmem:[#allocation2 + $0x70] sm:$0xff]
          %v1373 = vld [vmem:[#allocation2 + $0x78] sm:$0xff]
          %v1374 = vld [vmem:[#allocation2 + $0x80] sm:$0xff]
          %v1375 = vld [vmem:[#allocation2 + $0x88] sm:$0xff]
          %v1376 = vld [vmem:[#allocation2 + $0x90] sm:$0xff]
          %v1377 = vld [vmem:[#allocation2 + $0x98] sm:$0xff]
          %v1378 = vld [vmem:[#allocation2 + $0xa0] sm:$0xff]
          %v1379 = vld [vmem:[#allocation2 + $0xa8] sm:$0xff]
          %v1380 = vld [vmem:[#allocation2 + $0xb0] sm:$0xff]
          %v1381 = vld [vmem:[#allocation2 + $0xb8] sm:$0xff]
          %v1382 = vld [vmem:[#allocation2 + $0xc0] sm:$0xff]
          %v1383 = vld [vmem:[#allocation2 + $0xc8] sm:$0xff]
          %v1384 = vld [vmem:[#allocation2 + $0xd0] sm:$0xff]
          %v1385 = vld [vmem:[#allocation2 + $0xd8] sm:$0xff]
          %v1386 = vld [vmem:[#allocation2 + $0xe0] sm:$0xff]
          %v1387 = vld [vmem:[#allocation2 + $0xe8] sm:$0xff]
          %v1388 = vld [vmem:[#allocation2 + $0xf0] sm:$0xff]
          %v1389 = vld [vmem:[#allocation2 + $0xf8] sm:$0xff]
          %vm1390 = vcmp.ge.f32.partialorder %v1358, 1478.0
          %vm1391 = vcmp.ge.f32.partialorder %v1359, 1478.0
          %vm1392 = vcmp.ge.f32.partialorder %v1360, 1478.0
          %vm1393 = vcmp.ge.f32.partialorder %v1361, 1478.0
          %vm1394 = vcmp.ge.f32.partialorder %v1362, 1478.0
          %vm1395 = vcmp.ge.f32.partialorder %v1363, 1478.0
          %vm1396 = vcmp.ge.f32.partialorder %v1364, 1478.0
          %vm1397 = vcmp.ge.f32.partialorder %v1365, 1478.0
          %vm1398 = vcmp.ge.f32.partialorder %v1366, 1478.0
          %vm1399 = vcmp.ge.f32.partialorder %v1367, 1478.0
          %vm1400 = vcmp.ge.f32.partialorder %v1368, 1478.0
          %vm1401 = vcmp.ge.f32.partialorder %v1369, 1478.0
          %vm1402 = vcmp.ge.f32.partialorder %v1370, 1478.0
          %vm1403 = vcmp.ge.f32.partialorder %v1371, 1478.0
          %vm1404 = vcmp.ge.f32.partialorder %v1372, 1478.0
          %vm1405 = vcmp.ge.f32.partialorder %v1373, 1478.0
          %vm1406 = vcmp.ge.f32.partialorder %v1374, 1478.0
          %vm1407 = vcmp.ge.f32.partialorder %v1375, 1478.0
          %vm1408 = vcmp.ge.f32.partialorder %v1376, 1478.0
          %vm1409 = vcmp.ge.f32.partialorder %v1377, 1478.0
          %vm1410 = vcmp.ge.f32.partialorder %v1378, 1478.0
          %vm1411 = vcmp.ge.f32.partialorder %v1379, 1478.0
          %vm1412 = vcmp.ge.f32.partialorder %v1380, 1478.0
          %vm1413 = vcmp.ge.f32.partialorder %v1381, 1478.0
          %vm1414 = vcmp.ge.f32.partialorder %v1382, 1478.0
          %vm1415 = vcmp.ge.f32.partialorder %v1383, 1478.0
          %vm1416 = vcmp.ge.f32.partialorder %v1384, 1478.0
          %vm1417 = vcmp.ge.f32.partialorder %v1385, 1478.0
          %vm1418 = vcmp.ge.f32.partialorder %v1386, 1478.0
          %vm1419 = vcmp.ge.f32.partialorder %v1387, 1478.0
          %vm1420 = vcmp.ge.f32.partialorder %v1388, 1478.0
          %vm1421 = vcmp.ge.f32.partialorder %v1389, 1478.0
          %v1422 = vsel %vm1390, %v252, 0.0
          %v1423 = vsel %vm1391, %v253, 0.0
          %v1424 = vsel %vm1392, %v254, 0.0
          %v1425 = vsel %vm1393, %v255, 0.0
          %v1426 = vsel %vm1394, %v256, 0.0
          %v1427 = vsel %vm1395, %v257, 0.0
          %v1428 = vsel %vm1396, %v258, 0.0
          %v1429 = vsel %vm1397, %v259, 0.0
          %v1430 = vsel %vm1398, %v260, 0.0
          %v1431 = vsel %vm1399, %v261, 0.0
          %v1432 = vsel %vm1400, %v262, 0.0
          %v1433 = vsel %vm1401, %v263, 0.0
          %v1434 = vsel %vm1402, %v264, 0.0
          %v1435 = vsel %vm1403, %v265, 0.0
          %v1436 = vsel %vm1404, %v266, 0.0
          %v1437 = vsel %vm1405, %v267, 0.0
          %v1438 = vsel %vm1406, %v268, 0.0
          %v1439 = vsel %vm1407, %v269, 0.0
          %v1440 = vsel %vm1408, %v270, 0.0
          %v1441 = vsel %vm1409, %v271, 0.0
          %v1442 = vsel %vm1410, %v272, 0.0
          %v1443 = vsel %vm1411, %v273, 0.0
          %v1444 = vsel %vm1412, %v274, 0.0
          %v1445 = vsel %vm1413, %v275, 0.0
          %v1446 = vsel %vm1414, %v276, 0.0
          %v1447 = vsel %vm1415, %v277, 0.0
          %v1448 = vsel %vm1416, %v278, 0.0
          %v1449 = vsel %vm1417, %v279, 0.0
          %v1450 = vsel %vm1418, %v280, 0.0
          %v1451 = vsel %vm1419, %v281, 0.0
          %v1452 = vsel %vm1420, %v282, 0.0
          %v1453 = vsel %vm1421, %v283, 0.0
          %v1454 = vsel %vm1321, %v1422, 0.0
          %v1455 = vsel %vm1321, %v1423, 0.0
          %v1456 = vadd.f32 %v1454, %v1455
          %v1457 = vsel %vm1321, %v1424, 0.0
          %v1458 = vadd.f32 %v1456, %v1457
          %v1459 = vsel %vm1321, %v1425, 0.0
          %v1460 = vadd.f32 %v1458, %v1459
          %v1461 = vsel %vm1321, %v1426, 0.0
          %v1462 = vadd.f32 %v1460, %v1461
          %v1463 = vsel %vm1321, %v1427, 0.0
          %v1464 = vadd.f32 %v1462, %v1463
          %v1465 = vsel %vm1321, %v1428, 0.0
          %v1466 = vadd.f32 %v1464, %v1465
          %v1467 = vsel %vm1321, %v1429, 0.0
          %v1468 = vadd.f32 %v1466, %v1467
          %v1469 = vsel %vm1321, %v1430, 0.0
          %v1470 = vadd.f32 %v1468, %v1469
          %v1471 = vsel %vm1321, %v1431, 0.0
          %v1472 = vadd.f32 %v1470, %v1471
          %v1473 = vsel %vm1321, %v1432, 0.0
          %v1474 = vadd.f32 %v1472, %v1473
          %v1475 = vsel %vm1321, %v1433, 0.0
          %v1476 = vadd.f32 %v1474, %v1475
          %v1477 = vsel %vm1321, %v1434, 0.0
          %v1478 = vadd.f32 %v1476, %v1477
          %v1479 = vsel %vm1321, %v1435, 0.0
          %v1480 = vadd.f32 %v1478, %v1479
          %v1481 = vsel %vm1321, %v1436, 0.0
          %v1482 = vadd.f32 %v1480, %v1481
          %v1483 = vsel %vm1321, %v1437, 0.0
          %v1484 = vadd.f32 %v1482, %v1483
          %v1485 = vsel %vm1321, %v1438, 0.0
          %v1486 = vadd.f32 %v1484, %v1485
          %v1487 = vsel %vm1321, %v1439, 0.0
          %v1488 = vadd.f32 %v1486, %v1487
          %v1489 = vsel %vm1321, %v1440, 0.0
          %v1490 = vadd.f32 %v1488, %v1489
          %v1491 = vsel %vm1321, %v1441, 0.0
          %v1492 = vadd.f32 %v1490, %v1491
          %v1493 = vsel %vm1321, %v1442, 0.0
          %v1494 = vadd.f32 %v1492, %v1493
          %v1495 = vsel %vm1321, %v1443, 0.0
          %v1496 = vadd.f32 %v1494, %v1495
          %v1497 = vsel %vm1321, %v1444, 0.0
          %v1498 = vadd.f32 %v1496, %v1497
          %v1499 = vsel %vm1321, %v1445, 0.0
          %v1500 = vadd.f32 %v1498, %v1499
          %v1501 = vsel %vm1321, %v1446, 0.0
          %v1502 = vadd.f32 %v1500, %v1501
          %v1503 = vsel %vm1321, %v1447, 0.0
          %v1504 = vadd.f32 %v1502, %v1503
          %v1505 = vsel %vm1321, %v1448, 0.0
          %v1506 = vadd.f32 %v1504, %v1505
          %v1507 = vsel %vm1321, %v1449, 0.0
          %v1508 = vadd.f32 %v1506, %v1507
          %v1509 = vsel %vm1321, %v1450, 0.0
          %v1510 = vadd.f32 %v1508, %v1509
          %v1511 = vsel %vm1321, %v1451, 0.0
          %v1512 = vadd.f32 %v1510, %v1511
          %v1513 = vsel %vm1321, %v1452, 0.0
          %v1514 = vadd.f32 %v1512, %v1513
          %v1515 = vsel %vm1321, %v1453, 0.0
          %v1516 = vadd.f32 %v1514, %v1515
          %1517 = vadd.xlane.f32.xlu0 %v1516
          %v1518 = vpop.xlane.xlu0 %1517
          %v1519 = vrot.slane %v1518, 4
          %v1520 = vadd.f32 %v1518, %v1519
          %v1521 = vrot.slane %v1520, 2
          %v1522 = vadd.f32 %v1520, %v1521
          %v1523 = vrot.slane %v1522, 1
          %v1524 = vadd.f32 %v1522, %v1523
          %s1525 = vtos %v1524
          %v1526 = vsel %vm1390, 1.0, 0.0
          %v1527 = vsel %vm1391, 1.0, 0.0
          %v1528 = vsel %vm1392, 1.0, 0.0
          %v1529 = vsel %vm1393, 1.0, 0.0
          %v1530 = vsel %vm1394, 1.0, 0.0
          %v1531 = vsel %vm1395, 1.0, 0.0
          %v1532 = vsel %vm1396, 1.0, 0.0
          %v1533 = vsel %vm1397, 1.0, 0.0
          %v1534 = vsel %vm1398, 1.0, 0.0
          %v1535 = vsel %vm1399, 1.0, 0.0
          %v1536 = vsel %vm1400, 1.0, 0.0
          %v1537 = vsel %vm1401, 1.0, 0.0
          %v1538 = vsel %vm1402, 1.0, 0.0
          %v1539 = vsel %vm1403, 1.0, 0.0
          %v1540 = vsel %vm1404, 1.0, 0.0
          %v1541 = vsel %vm1405, 1.0, 0.0
          %v1542 = vsel %vm1406, 1.0, 0.0
          %v1543 = vsel %vm1407, 1.0, 0.0
          %v1544 = vsel %vm1408, 1.0, 0.0
          %v1545 = vsel %vm1409, 1.0, 0.0
          %v1546 = vsel %vm1410, 1.0, 0.0
          %v1547 = vsel %vm1411, 1.0, 0.0
          %v1548 = vsel %vm1412, 1.0, 0.0
          %v1549 = vsel %vm1413, 1.0, 0.0
          %v1550 = vsel %vm1414, 1.0, 0.0
          %v1551 = vsel %vm1415, 1.0, 0.0
          %v1552 = vsel %vm1416, 1.0, 0.0
          %v1553 = vsel %vm1417, 1.0, 0.0
          %v1554 = vsel %vm1418, 1.0, 0.0
          %v1555 = vsel %vm1419, 1.0, 0.0
          %v1556 = vsel %vm1420, 1.0, 0.0
          %v1557 = vsel %vm1421, 1.0, 0.0
          %v1558 = vsel %vm1321, %v1526, 0.0
          %v1559 = vsel %vm1321, %v1527, 0.0
          %v1560 = vadd.f32 %v1558, %v1559
          %v1561 = vsel %vm1321, %v1528, 0.0
          %v1562 = vadd.f32 %v1560, %v1561
          %v1563 = vsel %vm1321, %v1529, 0.0
          %v1564 = vadd.f32 %v1562, %v1563
          %v1565 = vsel %vm1321, %v1530, 0.0
          %v1566 = vadd.f32 %v1564, %v1565
          %v1567 = vsel %vm1321, %v1531, 0.0
          %v1568 = vadd.f32 %v1566, %v1567
          %v1569 = vsel %vm1321, %v1532, 0.0
          %v1570 = vadd.f32 %v1568, %v1569
          %v1571 = vsel %vm1321, %v1533, 0.0
          %v1572 = vadd.f32 %v1570, %v1571
          %v1573 = vsel %vm1321, %v1534, 0.0
          %v1574 = vadd.f32 %v1572, %v1573
          %v1575 = vsel %vm1321, %v1535, 0.0
          %v1576 = vadd.f32 %v1574, %v1575
          %v1577 = vsel %vm1321, %v1536, 0.0
          %v1578 = vadd.f32 %v1576, %v1577
          %v1579 = vsel %vm1321, %v1537, 0.0
          %v1580 = vadd.f32 %v1578, %v1579
          %v1581 = vsel %vm1321, %v1538, 0.0
          %v1582 = vadd.f32 %v1580, %v1581
          %v1583 = vsel %vm1321, %v1539, 0.0
          %v1584 = vadd.f32 %v1582, %v1583
          %v1585 = vsel %vm1321, %v1540, 0.0
          %v1586 = vadd.f32 %v1584, %v1585
          %v1587 = vsel %vm1321, %v1541, 0.0
          %v1588 = vadd.f32 %v1586, %v1587
          %v1589 = vsel %vm1321, %v1542, 0.0
          %v1590 = vadd.f32 %v1588, %v1589
          %v1591 = vsel %vm1321, %v1543, 0.0
          %v1592 = vadd.f32 %v1590, %v1591
          %v1593 = vsel %vm1321, %v1544, 0.0
          %v1594 = vadd.f32 %v1592, %v1593
          %v1595 = vsel %vm1321, %v1545, 0.0
          %v1596 = vadd.f32 %v1594, %v1595
          %v1597 = vsel %vm1321, %v1546, 0.0
          %v1598 = vadd.f32 %v1596, %v1597
          %v1599 = vsel %vm1321, %v1547, 0.0
          %v1600 = vadd.f32 %v1598, %v1599
          %v1601 = vsel %vm1321, %v1548, 0.0
          %v1602 = vadd.f32 %v1600, %v1601
          %v1603 = vsel %vm1321, %v1549, 0.0
          %v1604 = vadd.f32 %v1602, %v1603
          %v1605 = vsel %vm1321, %v1550, 0.0
          %v1606 = vadd.f32 %v1604, %v1605
          %v1607 = vsel %vm1321, %v1551, 0.0
          %v1608 = vadd.f32 %v1606, %v1607
          %v1609 = vsel %vm1321, %v1552, 0.0
          %v1610 = vadd.f32 %v1608, %v1609
          %v1611 = vsel %vm1321, %v1553, 0.0
          %v1612 = vadd.f32 %v1610, %v1611
          %v1613 = vsel %vm1321, %v1554, 0.0
          %v1614 = vadd.f32 %v1612, %v1613
          %v1615 = vsel %vm1321, %v1555, 0.0
          %v1616 = vadd.f32 %v1614, %v1615
          %v1617 = vsel %vm1321, %v1556, 0.0
          %v1618 = vadd.f32 %v1616, %v1617
          %v1619 = vsel %vm1321, %v1557, 0.0
          %v1620 = vadd.f32 %v1618, %v1619
          %1621 = vadd.xlane.f32.xlu0 %v1620
          %v1622 = vpop.xlane.xlu0 %1621
          %v1623 = vrot.slane %v1622, 4
          %v1624 = vadd.f32 %v1622, %v1623
          %v1625 = vrot.slane %v1624, 2
          %v1626 = vadd.f32 %v1624, %v1625
          %v1627 = vrot.slane %v1626, 1
          %v1628 = vadd.f32 %v1626, %v1627
          %s1629 = vtos %v1628
          %v1630 = vstv %s1525
          %1631 = vst [vmem:[%s194] sm:$0xff] %v1630
          %v1632 = vstv %s1629
          %1633 = vst [vmem:[%s201] sm:$0xff] %v1632
        $region36: #{tpu_custom_call.1} parent=27 // pred_fallthru
          _
        %s1634 = sand.u32 %s93, 1
        %s1635 = scalar_lea.sflag [#allocation4], %s1634
        %s1636 = sand.u32 %s93, 1
        %s1637 = smul.addr %s1636, 8
        %s1638 = scalar_lea.vmem [#allocation3], %s1637
        %s1639 = sand.u32 %s119, 1
        %s1640 = scalar_lea.sflag [#allocation6], %s1639
        %s1641 = sand.u32 %s119, 1
        %s1642 = smul.addr %s1641, 8
        %s1643 = scalar_lea.vmem [#allocation5], %s1642
        // Predicated region
        $region37: #{tpu_custom_call.1} parent=27 // pred_check
          %p1644 = pneg %p103
        $region38: #{tpu_custom_call.1} parent=27 // pred_check_branch
          %1646 = sbr.rel (%p1644) target = $region40
        $region39: #{tpu_custom_call.1} parent=27 // pred_region
          %1648 = vsyncadd %s1635, 0
          %s1649 = smul.addr %s25, 8
          %s1650 = scalar_lea.hbm %s2, %s1649
          %s1652 = sshll.u32 %s1638, 4
          %s1653 = int_to_ptr.vmem [resolvable:$true] %s1652
          %s1654 = sshll.u32 %s1650, 4
          %s1655 = int_to_ptr.hbm [resolvable:$true] %s1654
          %1657 = dma.vmem_to_hbm [thread:$0]  %s1653, 128, %s1655, %s1635
        $region40: #{tpu_custom_call.1} parent=27 // pred_fallthru
          _
        // Predicated region
        $region41: #{tpu_custom_call.1} parent=27 // pred_check
          %p1658 = pneg %p129
        $region42: #{tpu_custom_call.1} parent=27 // pred_check_branch
          %1660 = sbr.rel (%p1658) target = $region44
        $region43: #{tpu_custom_call.1} parent=27 // pred_region
          %1662 = vsyncadd %s1640, 0
          %s1663 = smul.addr %s25, 8
          %s1664 = scalar_lea.hbm %s3, %s1663
          %s1666 = sshll.u32 %s1643, 4
          %s1667 = int_to_ptr.vmem [resolvable:$true] %s1666
          %s1668 = sshll.u32 %s1664, 4
          %s1669 = int_to_ptr.hbm [resolvable:$true] %s1668
          %1671 = dma.vmem_to_hbm [thread:$0]  %s1667, 128, %s1669, %s1640
        $region44: #{tpu_custom_call.1} parent=27 // pred_fallthru
          _
      $region28: #{tpu_custom_call.1} parent=5 // pred_fallthru
        _
      %p1672 = scmp.le.s32.totalorder 2, %s16
      // Predicated region
      $region45: #{tpu_custom_call.1} parent=5 // pred_check
        %p1673 = pneg %p1672
      $region46: #{tpu_custom_call.1} parent=5 // pred_check_branch
        %1675 = sbr.rel (%p1673) target = $region48
      $region47: #{tpu_custom_call.1} parent=5 // pred_region
        %s1676 = ssub.s32 %s16, 2
        // Predicated region
        $region49: #{tpu_custom_call.1} parent=47 // pred_check
          %p1677 = pneg %p109
        $region50: #{tpu_custom_call.1} parent=47 // pred_check_branch
          %1679 = sbr.rel (%p1677) target = $region52
        $region51: #{tpu_custom_call.1} parent=47 // pred_region
          %s1680 = sand.u32 %s94, 1
          %s1681 = scalar_lea.sflag [#allocation4], %s1680
          %s1682 = sand.u32 %s94, 1
          %s1683 = smul.addr %s1682, 8
          %s1684 = scalar_lea.vmem [#allocation3], %s1683
          %1686 = dma.done %s1681, 128
        $region52: #{tpu_custom_call.1} parent=47 // pred_fallthru
          _
        // Predicated region
        $region53: #{tpu_custom_call.1} parent=47 // pred_check
          %p1687 = pneg %p135
        $region54: #{tpu_custom_call.1} parent=47 // pred_check_branch
          %1689 = sbr.rel (%p1687) target = $region56
        $region55: #{tpu_custom_call.1} parent=47 // pred_region
          %s1690 = sand.u32 %s120, 1
          %s1691 = scalar_lea.sflag [#allocation6], %s1690
          %s1692 = sand.u32 %s120, 1
          %s1693 = smul.addr %s1692, 8
          %s1694 = scalar_lea.vmem [#allocation5], %s1693
          %1696 = dma.done %s1691, 128
        $region56: #{tpu_custom_call.1} parent=47 // pred_fallthru
          _
      $region48: #{tpu_custom_call.1} parent=5 // pred_fallthru
        _
    $region6: #{tpu_custom_call.1} parent=1 // loop_footer
      %s20 = sadd.s32 1, %s16
    $region7: #{tpu_custom_call.1} parent=1 // loop_footer_branch
      %15 = sbr.rel target = $region3
    $region8: #{tpu_custom_call.1} parent=1 // loop_exit
      _
    %1697 = vsyncpa [#allocation4], 1
    %s1698 = scalar_lea.sflag [#allocation4], 1
    %1699 = vsyncpa %s1698, 1
    %1700 = vsyncpa [#allocation6], 1
    %s1701 = scalar_lea.sflag [#allocation6], 1
    %1702 = vsyncpa %s1701, 1

</llo_original>
